<compile_context>
chip_gen: v5e
topology: v5e:2x2
jax: 0.10.0
libtpu: 0.0.40
codegen_flags: <defaults>
</compile_context>

<pallas_src>
import numpy as np
import jax
import jax.numpy as jnp
from jax.experimental import pallas as pl
from jax.experimental.pallas import tpu as pltpu

# ----------------------- filter design (numpy, == scipy.signal.butter) ---------
SR = 16000.0
LOWER = 1000.0
UPPER = 4000.0
ORDER = 8
LANES = 128          # batch rows live on the lane axis
BLK = 128            # time-block length per grid step (MXU friendly)


def _butter_bandpass(order, wlo, whi):
    """Replicates scipy.signal.butter(order, [wlo, whi], 'bandpass')."""
    m = np.arange(-order + 1, order, 2)
    p = -np.exp(1j * np.pi * m / (2.0 * order))
    z = np.array([], dtype=complex)
    k = 1.0
    fs = 2.0
    warped = 2.0 * fs * np.tan(np.pi * np.array([wlo, whi]) / fs)
    bw = warped[1] - warped[0]
    wo = np.sqrt(warped[0] * warped[1])
    degree = len(p) - len(z)
    z_lp = z * bw / 2.0
    p_lp = p * bw / 2.0
    z_bp = np.concatenate((z_lp + np.sqrt(z_lp ** 2 - wo ** 2),
                           z_lp - np.sqrt(z_lp ** 2 - wo ** 2)))
    p_bp = np.concatenate((p_lp + np.sqrt(p_lp ** 2 - wo ** 2),
                           p_lp - np.sqrt(p_lp ** 2 - wo ** 2)))
    z_bp = np.append(z_bp, np.zeros(degree))
    k_bp = k * bw ** degree
    fs2 = 2.0 * fs
    degree2 = len(p_bp) - len(z_bp)
    z_d = (fs2 + z_bp) / (fs2 - z_bp)
    p_d = (fs2 + p_bp) / (fs2 - p_bp)
    z_d = np.append(z_d, -np.ones(degree2))
    k_d = k_bp * np.real(np.prod(fs2 - z_bp) / np.prod(fs2 - p_bp))
    b = np.real(k_d * np.poly(z_d))
    a = np.real(np.poly(p_d))
    return b, a


def _lfilter_zi(b, a):
    """Replicates scipy.signal.lfilter_zi for equal-length b, a."""
    b = np.asarray(b, dtype=np.float64)
    a = np.asarray(a, dtype=np.float64)
    if a[0] != 1.0:
        b = b / a[0]
        a = a / a[0]
    n = max(len(a), len(b))
    comp = np.zeros((n - 1, n - 1))
    comp[0, :] = -a[1:]
    comp[np.arange(1, n - 1), np.arange(0, n - 2)] = 1.0
    iminus_a = np.eye(n - 1) - comp.T
    rhs = b[1:] - a[1:] * b[0]
    return np.linalg.solve(iminus_a, rhs)


B_NP, A_NP = _butter_bandpass(ORDER, 2.0 * LOWER / SR, 2.0 * UPPER / SR)
ZI_NP = _lfilter_zi(B_NP, A_NP)
NTAPS = len(B_NP)                       # 17
NSTATE = NTAPS - 1                      # 16
EDGE = 3 * max(len(A_NP), len(B_NP))    # filtfilt default padlen = 51


def _blocked_operators(b, a, L):
    """Blocked (length-L) operators of the transposed-DF-II recursion.

    State:  z[t] = A z[t-1] + Bv x[t],   y[t] = b0 x[t] + z0[t-1]
    Block:  y_blk = Gx @ x_blk + Gz @ z_prev
            z_new = Phi @ z_prev + Gamma @ x_blk
    Exact linear algebra (same filter), derived in float64.
    """
    b = np.asarray(b, np.float64)
    a = np.asarray(a, np.float64)
    b = b / a[0]
    a = a / a[0]
    n = len(a) - 1
    A = np.zeros((n, n))
    A[:, 0] = -a[1:]
    A[np.arange(n - 1), np.arange(1, n)] = 1.0
    Bv = b[1:] - a[1:] * b[0]
    # powers of A
    Apows = [np.eye(n)]
    for _ in range(L):
        Apows.append(Apows[-1] @ A)
    # Gz[k, :] = e0^T A^k
    Gz = np.stack([Apows[k][0, :] for k in range(L)], axis=0)          # (L, n)
    # impulse response h[0] = b0, h[m] = e0^T A^{m-1} Bv
    h = np.zeros(L)
    h[0] = b[0]
    for m in range(1, L):
        h[m] = (Apows[m - 1] @ Bv)[0]
    Gx = np.zeros((L, L))
    for k in range(L):
        Gx[k, :k + 1] = h[k::-1]                                       # lower-tri Toeplitz
    Phi = Apows[L]                                                      # (n, n)
    Gamma = np.stack([Apows[L - 1 - j] @ Bv for j in range(L)], axis=1)  # (n, L)
    return Gx, Gz, Phi, Gamma


GX_NP, GZ_NP, PHI_NP, GAMMA_NP = _blocked_operators(B_NP, A_NP, BLK)


# ----------------------------- Pallas kernel -----------------------------------
def _block_scan_kernel(zinit_ref, gx_ref, gz_ref, phi_ref, gamma_ref, x_ref,
                       y_ref, z_ref):
    """One 128-sample block of the IIR scan, fully on the MXU.

    z_ref is a persistent VMEM scratch carrying the 16x128 filter state across
    grid steps (grid axis is 'arbitrary' == sequential).
    """
    @pl.when(pl.program_id(0) == 0)
    def _():
        z_ref[...] = zinit_ref[...]

    z = z_ref[...]                        # (NSTATE, LANES)
    x = x_ref[...]                        # (BLK, LANES)

    y_ref[...] = (
        jnp.dot(gx_ref[...], x, preferred_element_type=jnp.float32)
        + jnp.dot(gz_ref[...], z, preferred_element_type=jnp.float32))

    z_ref[...] = (
        jnp.dot(phi_ref[...], z, preferred_element_type=jnp.float32)
        + jnp.dot(gamma_ref[...], x, preferred_element_type=jnp.float32))


def _lfilter_blocks(z_init, x_pad, gx, gz, phi, gamma):
    """Causal lfilter over (t_pad, LANES) with initial state z_init."""
    t_pad = x_pad.shape[0]
    nblk = t_pad // BLK
    return pl.pallas_call(
        _block_scan_kernel,
        out_shape=jax.ShapeDtypeStruct((t_pad, LANES), jnp.float32),
        grid=(nblk,),
        in_specs=[
            pl.BlockSpec((NSTATE, LANES), lambda i: (0, 0)),    # z_init
            pl.BlockSpec((BLK, BLK), lambda i: (0, 0)),         # Gx
            pl.BlockSpec((BLK, NSTATE), lambda i: (0, 0)),      # Gz
            pl.BlockSpec((NSTATE, NSTATE), lambda i: (0, 0)),   # Phi
            pl.BlockSpec((NSTATE, BLK), lambda i: (0, 0)),      # Gamma
            pl.BlockSpec((BLK, LANES), lambda i: (i, 0)),       # x block
        ],
        out_specs=pl.BlockSpec((BLK, LANES), lambda i: (i, 0)),
        scratch_shapes=[pltpu.VMEM((NSTATE, LANES), jnp.float32)],
        compiler_params=pltpu.CompilerParams(
            dimension_semantics=("arbitrary",)),
    )(z_init, gx, gz, phi, gamma, x_pad)


# ------------------------------- wrapper ----------------------------------------
def bandpass(audio):
    """audio: (batch, time) float32 -> zero-phase bandpass filtered, same shape."""
    audio = jnp.asarray(audio, jnp.float32)
    bsz, tlen = audio.shape
    assert tlen > EDGE, "filtfilt requires signal length > padlen"
    assert bsz <= LANES

    gx = jnp.asarray(GX_NP, jnp.float32)
    gz = jnp.asarray(GZ_NP, jnp.float32)
    phi = jnp.asarray(PHI_NP, jnp.float32)
    gamma = jnp.asarray(GAMMA_NP, jnp.float32)
    zi = jnp.asarray(ZI_NP, jnp.float32)

    # odd extension (== scipy.signal._arraytools.odd_ext), plain-JAX glue
    left = 2.0 * audio[:, :1] - audio[:, EDGE:0:-1]
    right = 2.0 * audio[:, -1:] - audio[:, -2:-(EDGE + 2):-1]
    ext = jnp.concatenate([left, audio, right], axis=1)          # (B, t_ext)
    t_ext = tlen + 2 * EDGE
    nblk = pl.cdiv(t_ext, BLK)
    t_pad = nblk * BLK

    # layout: (t_pad, LANES) -- time on sublanes, batch rows on lanes (zero pad)
    x_fwd = jnp.zeros((t_pad, LANES), jnp.float32).at[:t_ext, :bsz].set(ext.T)
    z_fwd = jnp.zeros((NSTATE, LANES), jnp.float32).at[:, :bsz].set(
        zi[:, None] * ext[:, 0][None, :])

    # forward lfilter over the odd-extended signal
    y_fwd = _lfilter_blocks(z_fwd, x_fwd, gx, gz, phi, gamma)    # (t_pad, LANES)

    # backward pass: filter the time-reversed forward output with the same kernel
    y_rev = y_fwd[:t_ext][::-1]                                  # (t_ext, LANES)
    x_bwd = jnp.zeros((t_pad, LANES), jnp.float32).at[:t_ext].set(y_rev)
    z_bwd = zi[:, None] * y_rev[0:1, :]                          # (NSTATE, LANES)

    y_bwd = _lfilter_blocks(z_bwd, x_bwd, gx, gz, phi, gamma)    # (t_pad, LANES)

    y = y_bwd[:t_ext][::-1][:, :bsz].T                           # (B, t_ext)
    return y[:, EDGE:-EDGE]                                      # strip padding


if __name__ == "__main__":
    key = jax.random.PRNGKey(0)
    audio = jax.random.normal(key, (4, 256), dtype=jnp.float32)  # (batch, samples)
    out = jax.jit(bandpass)(audio)
    out = jax.block_until_ready(out)
    assert out.shape == audio.shape, out.shape
    assert out.dtype == jnp.float32
    assert bool(jnp.all(jnp.isfinite(out)))
    print("KERNEL_OK")
</pallas_src>

<mosaic_0001>
module attributes {stable_mosaic.version = 11 : i64} {
  func.func @_block_scan_kernel(%arg0: i32, %arg1: memref<16x128xf32, #tpu.memory_space<vmem>>, %arg2: memref<128x128xf32, #tpu.memory_space<vmem>>, %arg3: memref<128x16xf32, #tpu.memory_space<vmem>>, %arg4: memref<16x16xf32, #tpu.memory_space<vmem>>, %arg5: memref<16x128xf32, #tpu.memory_space<vmem>>, %arg6: memref<128x128xf32, #tpu.memory_space<vmem>>, %arg7: memref<128x128xf32, #tpu.memory_space<vmem>>, %arg8: memref<16x128xf32, #tpu.memory_space<vmem>>) attributes {dimension_semantics = [#tpu.dimension_semantics<arbitrary>], iteration_bounds = array<i64: 3>, scalar_prefetch = 0 : i64, scratch_operands = 1 : i64, tpu.core_type = #tpu.core_type<tc>, window_params = [{pipeline_mode = #tpu.pipeline_mode<synchronous>, transform_indices = @transform_0, window_bounds = array<i64: 16, 128>}, {pipeline_mode = #tpu.pipeline_mode<synchronous>, transform_indices = @transform_1, window_bounds = array<i64: 128, 128>}, {pipeline_mode = #tpu.pipeline_mode<synchronous>, transform_indices = @transform_2, window_bounds = array<i64: 128, 16>}, {pipeline_mode = #tpu.pipeline_mode<synchronous>, transform_indices = @transform_3, window_bounds = array<i64: 16, 16>}, {pipeline_mode = #tpu.pipeline_mode<synchronous>, transform_indices = @transform_4, window_bounds = array<i64: 16, 128>}, {transform_indices = @transform_5, window_bounds = array<i64: 128, 128>}, {transform_indices = @transform_6, window_bounds = array<i64: 128, 128>}]} {
    %c0_i32 = arith.constant 0 : i32
    %0 = arith.cmpi eq, %arg0, %c0_i32 : i32
    %1 = arith.extui %0 : i1 to i32
    %c0_i32_0 = arith.constant 0 : i32
    %2 = arith.cmpi ne, %1, %c0_i32_0 : i32
    scf.if %2 {
      %c0_19 = arith.constant 0 : index
      %c0_20 = arith.constant 0 : index
      %17 = vector.load %arg1[%c0_19, %c0_20] : memref<16x128xf32, #tpu.memory_space<vmem>>, vector<16x128xf32>
      %c0_21 = arith.constant 0 : index
      %c0_22 = arith.constant 0 : index
      %18 = vector.load %arg8[%c0_21, %c0_22] : memref<16x128xf32, #tpu.memory_space<vmem>>, vector<16x128xf32>
      tpu.vector_store %arg8[%c0_21, %c0_22], %17 {strides = array<i32>} : memref<16x128xf32, #tpu.memory_space<vmem>>, vector<16x128xf32>,
    } else {
    }
    %c0 = arith.constant 0 : index
    %c0_1 = arith.constant 0 : index
    %3 = vector.load %arg8[%c0, %c0_1] : memref<16x128xf32, #tpu.memory_space<vmem>>, vector<16x128xf32>
    %c0_2 = arith.constant 0 : index
    %c0_3 = arith.constant 0 : index
    %4 = vector.load %arg6[%c0_2, %c0_3] : memref<128x128xf32, #tpu.memory_space<vmem>>, vector<128x128xf32>
    %c0_4 = arith.constant 0 : index
    %c0_5 = arith.constant 0 : index
    %5 = vector.load %arg2[%c0_4, %c0_5] : memref<128x128xf32, #tpu.memory_space<vmem>>, vector<128x128xf32>
    %cst = arith.constant dense<0.000000e+00> : vector<128x128xf32>
    %6 = tpu.matmul %5, %4, %cst {dimension_numbers = #tpu.dot_dimension_numbers<[1], [0], [0], [1], [0, 0, 1, 1], [], []>} : vector<128x128xf32>, vector<128x128xf32>, vector<128x128xf32> -> vector<128x128xf32>
    %c0_6 = arith.constant 0 : index
    %c0_7 = arith.constant 0 : index
    %7 = vector.load %arg3[%c0_6, %c0_7] : memref<128x16xf32, #tpu.memory_space<vmem>>, vector<128x16xf32>
    %cst_8 = arith.constant dense<0.000000e+00> : vector<128x128xf32>
    %8 = tpu.matmul %7, %3, %cst_8 {dimension_numbers = #tpu.dot_dimension_numbers<[1], [0], [0], [1], [0, 0, 1, 1], [], []>} : vector<128x16xf32>, vector<16x128xf32>, vector<128x128xf32> -> vector<128x128xf32>
    %9 = arith.addf %6, %8 : vector<128x128xf32>
    %c0_9 = arith.constant 0 : index
    %c0_10 = arith.constant 0 : index
    %10 = vector.load %arg7[%c0_9, %c0_10] : memref<128x128xf32, #tpu.memory_space<vmem>>, vector<128x128xf32>
    tpu.vector_store %arg7[%c0_9, %c0_10], %9 {strides = array<i32>} : memref<128x128xf32, #tpu.memory_space<vmem>>, vector<128x128xf32>,
    %c0_11 = arith.constant 0 : index
    %c0_12 = arith.constant 0 : index
    %11 = vector.load %arg4[%c0_11, %c0_12] : memref<16x16xf32, #tpu.memory_space<vmem>>, vector<16x16xf32>
    %cst_13 = arith.constant dense<0.000000e+00> : vector<16x128xf32>
    %12 = tpu.matmul %11, %3, %cst_13 {dimension_numbers = #tpu.dot_dimension_numbers<[1], [0], [0], [1], [0, 0, 1, 1], [], []>} : vector<16x16xf32>, vector<16x128xf32>, vector<16x128xf32> -> vector<16x128xf32>
    %c0_14 = arith.constant 0 : index
    %c0_15 = arith.constant 0 : index
    %13 = vector.load %arg5[%c0_14, %c0_15] : memref<16x128xf32, #tpu.memory_space<vmem>>, vector<16x128xf32>
    %cst_16 = arith.constant dense<0.000000e+00> : vector<16x128xf32>
    %14 = tpu.matmul %13, %4, %cst_16 {dimension_numbers = #tpu.dot_dimension_numbers<[1], [0], [0], [1], [0, 0, 1, 1], [], []>} : vector<16x128xf32>, vector<128x128xf32>, vector<16x128xf32> -> vector<16x128xf32>
    %15 = arith.addf %12, %14 : vector<16x128xf32>
    %c0_17 = arith.constant 0 : index
    %c0_18 = arith.constant 0 : index
    %16 = vector.load %arg8[%c0_17, %c0_18] : memref<16x128xf32, #tpu.memory_space<vmem>>, vector<16x128xf32>
    tpu.vector_store %arg8[%c0_17, %c0_18], %15 {strides = array<i32>} : memref<16x128xf32, #tpu.memory_space<vmem>>, vector<16x128xf32>,
    return
  }
  func.func @transform_0(%arg0: i32) -> (i32, i32) {
    %c0_i32 = arith.constant 0 : i32
    %c0_i32_0 = arith.constant 0 : i32
    %c0_i32_1 = arith.constant 0 : i32
    return %c0_i32, %c0_i32_0 : i32, i32
  }
  func.func @transform_1(%arg0: i32) -> (i32, i32) {
    %c0_i32 = arith.constant 0 : i32
    %c0_i32_0 = arith.constant 0 : i32
    %c0_i32_1 = arith.constant 0 : i32
    return %c0_i32, %c0_i32_0 : i32, i32
  }
  func.func @transform_2(%arg0: i32) -> (i32, i32) {
    %c0_i32 = arith.constant 0 : i32
    %c0_i32_0 = arith.constant 0 : i32
    %c0_i32_1 = arith.constant 0 : i32
    return %c0_i32, %c0_i32_0 : i32, i32
  }
  func.func @transform_3(%arg0: i32) -> (i32, i32) {
    %c0_i32 = arith.constant 0 : i32
    %c0_i32_0 = arith.constant 0 : i32
    %c0_i32_1 = arith.constant 0 : i32
    return %c0_i32, %c0_i32_0 : i32, i32
  }
  func.func @transform_4(%arg0: i32) -> (i32, i32) {
    %c0_i32 = arith.constant 0 : i32
    %c0_i32_0 = arith.constant 0 : i32
    %c0_i32_1 = arith.constant 0 : i32
    return %c0_i32, %c0_i32_0 : i32, i32
  }
  func.func @transform_5(%arg0: i32) -> (i32, i32) {
    %c0_i32 = arith.constant 0 : i32
    %c0_i32_0 = arith.constant 0 : i32
    return %arg0, %c0_i32 : i32, i32
  }
  func.func @transform_6(%arg0: i32) -> (i32, i32) {
    %c0_i32 = arith.constant 0 : i32
    %c0_i32_0 = arith.constant 0 : i32
    return %arg0, %c0_i32 : i32, i32
  }
}

</mosaic_0001>

<llo_original>
// kernel: reverse.1
$region0: #{reverse.1}
  %s0 = inlined_call_operand.vmem [shape: f32[358,4], index: 0, kind: input, shape index: {}]
  %s1 = inlined_call_operand.vmem [shape: f32[358,4], index: 1, kind: output, shape index: {}]
  $region1: #{reverse.1} parent=0
    #allocation0 [shape = 'u8[139264]{0}', space=vmem, size = 0x22000, scoped, tag = 'operand span for operand 0']
    #allocation1 [shape = 'u8[131072]{0}', space=vmem, size = 0x20000, scoped, tag = 'operand span for operand 1']
    loop: start=0, step=1, limit=5
    $region2: #{reverse.1} parent=1 // loop_pre_header
      _
    $region3: #{reverse.1} parent=1 // loop_header
      %s3 = sphi 0, %s7
      %p4 = scmp.ge.s32.totalorder %s3, 5
      %s10 = sphi 0, %s22
      %s11 = sphi 0, %s18
      %s12 = sphi 0, %s10
      %s13 = sphi 0, %s11
      %s14 = sphi 0, %s12
      %s15 = sphi 0, %s13
    $region4: #{reverse.1} parent=1 // loop_header_branch
      %6 = sbr.rel (%p4) target = $region8
    $region5: #{reverse.1} parent=1 // loop_body
      %s8 = ssub.s32 %s3, 1
      %s9 = ssub.s32 %s3, 2
      %s16 = sadd.s32 1, %s11
      %p17 = scmp.ge.s32.totalorder %s16, 1
      %s18 = scalar_select %p17, 0, %s16
      %s19 = sadd.s32 1, %s10
      %s20 = scalar_select %p17, %s19, %s10
      %p21 = scmp.ge.s32.totalorder %s20, 3
      %s22 = scalar_select %p21, 0, %s20
      %p23 = scmp.le.s32.totalorder 1, %s3
      %p24 = scmp.lt.s32.totalorder %s3, 4
      %p25 = pnand %p23, %p24
      %p26 = pneg %p25
      // Predicated region
      $region9: #{reverse.1} parent=5 // pred_check
        _
      $region10: #{reverse.1} parent=5 // pred_check_branch
        %28 = sbr.rel (%p25) target = $region12
      $region11: #{reverse.1} parent=5 // pred_region
        %s29 = ssub.s32 %s3, 1
      $region12: #{reverse.1} parent=5 // pred_fallthru
        _
      %p30 = scmp.lt.s32.totalorder %s3, 3
      // Predicated region
      $region13: #{reverse.1} parent=5 // pred_check
        %p31 = pneg %p30
      $region14: #{reverse.1} parent=5 // pred_check_branch
        %33 = sbr.rel (%p31) target = $region16
      $region15: #{reverse.1} parent=5 // pred_region
        %s34 = sand.u32 %s3, 1
        %s35 = sand.u32 %s3, 1
        %s36 = smul.addr %s35, 136
        %s37 = scalar_lea.vmem [#allocation0], %s36
        %s38 = ssub.s32 2, %s10
        %s39 = smul.u32 16, %s38
        %s40 = ssub.s32 4, %s39
        %p41 = scmp.gt.s32.totalorder %s40, 0
        %s42 = scalar_select %p41, %s40, 0
        %s43 = ssub.s32 17, %s42
        %s44 = smul.u32 8, %s43
        %p45 = scmp.ne.s32.totalorder 0, %s44
        %s46 = sadd.s32 %s39, %s42
        %s47 = ssub.s32 %s46, 4
        %s48 = sadd.s32 %s11, %s47
        %s49 = smul.addr %s48, 8
        %s50 = scalar_lea.vmem %s0, %s49
        %s51 = smul.addr %s42, 8
        %s52 = scalar_lea.vmem %s37, %s51 [#allocation0]
        %s53 = ssub.s32 17, %s42
        // Predicated region
        $region17: #{reverse.1} parent=15 // pred_check
          %p54 = pneg %p45
        $region18: #{reverse.1} parent=15 // pred_check_branch
          %56 = sbr.rel (%p54) target = $region20
        $region19: #{reverse.1} parent=15 // pred_region
          // Predicated region
          $region21: #{reverse.1} parent=19 // pred_check
            _
          $region22: #{reverse.1} parent=19 // pred_check_branch
            %58 = sbr.rel (0) target = $region24
          $region23: #{reverse.1} parent=19 // pred_region
            // Predicated region
            $region43: #{reverse.1} parent=23 // pred_check
              _
            $region44: #{reverse.1} parent=23 // pred_check_branch
              %141 = sbr.rel (0) target = $region46
            $region45: #{reverse.1} parent=23 // pred_region
              %s142 = sdiv.u32.pop %s53, 17
              %s143 = srem.u32.pop %s53, 17
              // While loop
              $region47: #{reverse.1} parent=45 // loop_pre_header
                _
              $region48: #{reverse.1} parent=45 // loop_header
                %s145 = sphi 0, %s147
                %p146 = scmp.ge.s32.totalorder %s145, %s142
                %s150 = sphi 0, %s189
                %s151 = sphi %s50, %s192
                %s152 = sphi %s52, %s193
              $region49: #{reverse.1} parent=45 // loop_header_branch
                %149 = sbr.rel (%p146) target = $region53
              $region50: #{reverse.1} parent=45 // loop_body
                %v153 = vld [vmem:[%s151] sm:$0xff]
                %154 = vst [vmem:[%s152] sm:$0xff] %v153
                %v155 = vld [vmem:[%s151 + $0x8] sm:$0xff]
                %156 = vst [vmem:[%s152 + $0x8] sm:$0xff] %v155
                %v157 = vld [vmem:[%s151 + $0x10] sm:$0xff]
                %158 = vst [vmem:[%s152 + $0x10] sm:$0xff] %v157
                %v159 = vld [vmem:[%s151 + $0x18] sm:$0xff]
                %160 = vst [vmem:[%s152 + $0x18] sm:$0xff] %v159
                %v161 = vld [vmem:[%s151 + $0x20] sm:$0xff]
                %162 = vst [vmem:[%s152 + $0x20] sm:$0xff] %v161
                %v163 = vld [vmem:[%s151 + $0x28] sm:$0xff]
                %164 = vst [vmem:[%s152 + $0x28] sm:$0xff] %v163
                %v165 = vld [vmem:[%s151 + $0x30] sm:$0xff]
                %166 = vst [vmem:[%s152 + $0x30] sm:$0xff] %v165
                %v167 = vld [vmem:[%s151 + $0x38] sm:$0xff]
                %168 = vst [vmem:[%s152 + $0x38] sm:$0xff] %v167
                %v169 = vld [vmem:[%s151 + $0x40] sm:$0xff]
                %170 = vst [vmem:[%s152 + $0x40] sm:$0xff] %v169
                %v171 = vld [vmem:[%s151 + $0x48] sm:$0xff]
                %172 = vst [vmem:[%s152 + $0x48] sm:$0xff] %v171
                %v173 = vld [vmem:[%s151 + $0x50] sm:$0xff]
                %174 = vst [vmem:[%s152 + $0x50] sm:$0xff] %v173
                %v175 = vld [vmem:[%s151 + $0x58] sm:$0xff]
                %176 = vst [vmem:[%s152 + $0x58] sm:$0xff] %v175
                %v177 = vld [vmem:[%s151 + $0x60] sm:$0xff]
                %178 = vst [vmem:[%s152 + $0x60] sm:$0xff] %v177
                %v179 = vld [vmem:[%s151 + $0x68] sm:$0xff]
                %180 = vst [vmem:[%s152 + $0x68] sm:$0xff] %v179
                %v181 = vld [vmem:[%s151 + $0x70] sm:$0xff]
                %182 = vst [vmem:[%s152 + $0x70] sm:$0xff] %v181
                %v183 = vld [vmem:[%s151 + $0x78] sm:$0xff]
                %184 = vst [vmem:[%s152 + $0x78] sm:$0xff] %v183
                %v185 = vld [vmem:[%s151 + $0x80] sm:$0xff]
                %186 = vst [vmem:[%s152 + $0x80] sm:$0xff] %v185
                %s187 = sadd.s32 1, %s150
                %p188 = scmp.ge.s32.totalorder %s187, %s142
                %s189 = scalar_select %p188, 0, %s187
                %s190 = smul.u32 %s189, 136
                %s191 = smul.u32 %s189, 136
                %s192 = scalar_lea.vmem %s50, %s190
                %s193 = scalar_lea.vmem %s52, %s191 [#allocation0]
              $region51: #{reverse.1} parent=45 // loop_footer
                %s147 = sadd.s32 %s145, 1
              $region52: #{reverse.1} parent=45 // loop_footer_branch
                %144 = sbr.rel target = $region48
              $region53: #{reverse.1} parent=45 // loop_exit
                _
              %s194 = sdiv.u32.pop %s53, 17
              %s195 = srem.u32.pop %s53, 17
              %s196 = smul.u32 %s194, 17
              %s197 = smul.u32 8, %s196
              %s198 = scalar_lea.vmem %s50, %s197
              %s199 = smul.u32 8, %s196
              %s200 = scalar_lea.vmem %s52, %s199 [#allocation0]
              // While loop
              $region54: #{reverse.1} parent=45 // loop_pre_header
                _
              $region55: #{reverse.1} parent=45 // loop_header
                %s202 = sphi 0, %s204
                %p203 = scmp.ge.s32.totalorder %s202, %s195
                %s207 = sphi 0, %s214
                %s208 = sphi %s198, %s217
                %s209 = sphi %s200, %s218
              $region56: #{reverse.1} parent=45 // loop_header_branch
                %206 = sbr.rel (%p203) target = $region60
              $region57: #{reverse.1} parent=45 // loop_body
                %v210 = vld [vmem:[%s208] sm:$0xff]
                %211 = vst [vmem:[%s209] sm:$0xff] %v210
                %s212 = sadd.s32 1, %s207
                %p213 = scmp.ge.s32.totalorder %s212, %s195
                %s214 = scalar_select %p213, 0, %s212
                %s215 = smul.u32 %s214, 8
                %s216 = smul.u32 %s214, 8
                %s217 = scalar_lea.vmem %s198, %s215
                %s218 = scalar_lea.vmem %s200, %s216 [#allocation0]
              $region58: #{reverse.1} parent=45 // loop_footer
                %s204 = sadd.s32 %s202, 1
              $region59: #{reverse.1} parent=45 // loop_footer_branch
                %201 = sbr.rel target = $region55
              $region60: #{reverse.1} parent=45 // loop_exit
                _
            $region46: #{reverse.1} parent=23 // pred_fallthru
              _
            // Predicated region
            $region61: #{reverse.1} parent=23 // pred_check
              _
            $region62: #{reverse.1} parent=23 // pred_check_branch
              %220 = sbr.rel target = $region64
            $region63: #{reverse.1} parent=23 // pred_region
              _
            $region64: #{reverse.1} parent=23 // pred_fallthru
              _
          $region24: #{reverse.1} parent=19 // pred_fallthru
            _
          // Predicated region
          $region25: #{reverse.1} parent=19 // pred_check
            _
          $region26: #{reverse.1} parent=19 // pred_check_branch
            %60 = sbr.rel target = $region28
          $region27: #{reverse.1} parent=19 // pred_region
            %s62 = ssub.s32 256, 1
            %s63 = sdiv.u32.pop %s53, 17
            %s64 = srem.u32.pop %s53, 17
            // While loop
            $region29: #{reverse.1} parent=27 // loop_pre_header
              _
            $region30: #{reverse.1} parent=27 // loop_header
              %s66 = sphi 0, %s68
              %p67 = scmp.ge.s32.totalorder %s66, %s63
              %s71 = sphi 0, %s110
              %s72 = sphi %s50, %s113
              %s73 = sphi %s52, %s114
            $region31: #{reverse.1} parent=27 // loop_header_branch
              %70 = sbr.rel (%p67) target = $region35
            $region32: #{reverse.1} parent=27 // loop_body
              %v74 = vld [vmem:[%s72] sm:%s62]
              %75 = vst [vmem:[%s73] sm:%s62] %v74
              %v76 = vld [vmem:[%s72 + $0x8] sm:%s62]
              %77 = vst [vmem:[%s73 + $0x8] sm:%s62] %v76
              %v78 = vld [vmem:[%s72 + $0x10] sm:%s62]
              %79 = vst [vmem:[%s73 + $0x10] sm:%s62] %v78
              %v80 = vld [vmem:[%s72 + $0x18] sm:%s62]
              %81 = vst [vmem:[%s73 + $0x18] sm:%s62] %v80
              %v82 = vld [vmem:[%s72 + $0x20] sm:%s62]
              %83 = vst [vmem:[%s73 + $0x20] sm:%s62] %v82
              %v84 = vld [vmem:[%s72 + $0x28] sm:%s62]
              %85 = vst [vmem:[%s73 + $0x28] sm:%s62] %v84
              %v86 = vld [vmem:[%s72 + $0x30] sm:%s62]
              %87 = vst [vmem:[%s73 + $0x30] sm:%s62] %v86
              %v88 = vld [vmem:[%s72 + $0x38] sm:%s62]
              %89 = vst [vmem:[%s73 + $0x38] sm:%s62] %v88
              %v90 = vld [vmem:[%s72 + $0x40] sm:%s62]
              %91 = vst [vmem:[%s73 + $0x40] sm:%s62] %v90
              %v92 = vld [vmem:[%s72 + $0x48] sm:%s62]
              %93 = vst [vmem:[%s73 + $0x48] sm:%s62] %v92
              %v94 = vld [vmem:[%s72 + $0x50] sm:%s62]
              %95 = vst [vmem:[%s73 + $0x50] sm:%s62] %v94
              %v96 = vld [vmem:[%s72 + $0x58] sm:%s62]
              %97 = vst [vmem:[%s73 + $0x58] sm:%s62] %v96
              %v98 = vld [vmem:[%s72 + $0x60] sm:%s62]
              %99 = vst [vmem:[%s73 + $0x60] sm:%s62] %v98
              %v100 = vld [vmem:[%s72 + $0x68] sm:%s62]
              %101 = vst [vmem:[%s73 + $0x68] sm:%s62] %v100
              %v102 = vld [vmem:[%s72 + $0x70] sm:%s62]
              %103 = vst [vmem:[%s73 + $0x70] sm:%s62] %v102
              %v104 = vld [vmem:[%s72 + $0x78] sm:%s62]
              %105 = vst [vmem:[%s73 + $0x78] sm:%s62] %v104
              %v106 = vld [vmem:[%s72 + $0x80] sm:%s62]
              %107 = vst [vmem:[%s73 + $0x80] sm:%s62] %v106
              %s108 = sadd.s32 1, %s71
              %p109 = scmp.ge.s32.totalorder %s108, %s63
              %s110 = scalar_select %p109, 0, %s108
              %s111 = smul.u32 %s110, 136
              %s112 = smul.u32 %s110, 136
              %s113 = scalar_lea.vmem %s50, %s111
              %s114 = scalar_lea.vmem %s52, %s112 [#allocation0]
            $region33: #{reverse.1} parent=27 // loop_footer
              %s68 = sadd.s32 %s66, 1
            $region34: #{reverse.1} parent=27 // loop_footer_branch
              %65 = sbr.rel target = $region30
            $region35: #{reverse.1} parent=27 // loop_exit
              _
            %s115 = sdiv.u32.pop %s53, 17
            %s116 = srem.u32.pop %s53, 17
            %s117 = smul.u32 %s115, 17
            %s118 = smul.u32 8, %s117
            %s119 = scalar_lea.vmem %s50, %s118
            %s120 = smul.u32 8, %s117
            %s121 = scalar_lea.vmem %s52, %s120 [#allocation0]
            // While loop
            $region36: #{reverse.1} parent=27 // loop_pre_header
              _
            $region37: #{reverse.1} parent=27 // loop_header
              %s123 = sphi 0, %s125
              %p124 = scmp.ge.s32.totalorder %s123, %s116
              %s128 = sphi 0, %s135
              %s129 = sphi %s119, %s138
              %s130 = sphi %s121, %s139
            $region38: #{reverse.1} parent=27 // loop_header_branch
              %127 = sbr.rel (%p124) target = $region42
            $region39: #{reverse.1} parent=27 // loop_body
              %v131 = vld [vmem:[%s129] sm:%s62]
              %132 = vst [vmem:[%s130] sm:%s62] %v131
              %s133 = sadd.s32 1, %s128
              %p134 = scmp.ge.s32.totalorder %s133, %s116
              %s135 = scalar_select %p134, 0, %s133
              %s136 = smul.u32 %s135, 8
              %s137 = smul.u32 %s135, 8
              %s138 = scalar_lea.vmem %s119, %s136
              %s139 = scalar_lea.vmem %s121, %s137 [#allocation0]
            $region40: #{reverse.1} parent=27 // loop_footer
              %s125 = sadd.s32 %s123, 1
            $region41: #{reverse.1} parent=27 // loop_footer_branch
              %122 = sbr.rel target = $region37
            $region42: #{reverse.1} parent=27 // loop_exit
              _
          $region28: #{reverse.1} parent=19 // pred_fallthru
            _
        $region20: #{reverse.1} parent=15 // pred_fallthru
          _
        %221 = vnop
      $region16: #{reverse.1} parent=5 // pred_fallthru
        _
      %p222 = scmp.le.s32.totalorder 1, %s3
      %p223 = scmp.lt.s32.totalorder %s3, 4
      %p224 = pnand %p222, %p223
      %p225 = pneg %p224
      // Predicated region
      $region65: #{reverse.1} parent=5 // pred_check
        _
      $region66: #{reverse.1} parent=5 // pred_check_branch
        %227 = sbr.rel (%p224) target = $region68
      $region67: #{reverse.1} parent=5 // pred_region
        %s228 = ssub.s32 %s3, 1
        %s229 = sand.u32 %s8, 1
        %s230 = sand.u32 %s8, 1
        %s231 = smul.addr %s230, 136
        %s232 = scalar_lea.vmem [#allocation0], %s231
        %s233 = sand.u32 %s8, 1
        %s234 = sand.u32 %s8, 1
        %s235 = smul.addr %s234, 136
        %s236 = scalar_lea.vmem [#allocation0], %s235
        %s237 = sand.u32 %s8, 1
        %s238 = sand.u32 %s8, 1
        %s239 = smul.addr %s238, 128
        %s240 = scalar_lea.vmem [#allocation1], %s239
        %s241 = ssub.s32 2, %s12
        %s242 = smul.u32 16, %s241
        %s243 = ssub.s32 4, %s242
        %p244 = scmp.gt.s32.totalorder %s243, 0
        %s245 = scalar_select %p244, %s243, 0
        %s246 = ssub.s32 17, %s245
        %s247 = smul.u32 8, %s246
        %s248 = smul.u32 16, %s12
        %s249 = ssub.s32 45, %s248
        %p250 = scmp.lt.s32.totalorder %s249, 16
        %s251 = scalar_select %p250, %s249, 16
        %s252 = smul.u32 8, %s251
        %s253 = scalar_lea.vmem %s232, 120 [#allocation0]
        %s254 = scalar_lea.vmem %s253, 7 [#allocation0]
        %v255 = vld [vmem:[%s254] ss:$-1 sm:$0xff]
        %v256 = vrot.slane %v255, 2
        %257 = vst [vmem:[%s240] sm:$0xff] %v256
        %s258 = scalar_lea.vmem %s232, 128 [#allocation0]
        %s259 = scalar_lea.vmem %s258, 7 [#allocation0]
        %v260 = vld [vmem:[%s259] ss:$-1 sm:$0xff]
        %v261 = vrot.slane %v260, 2
        %v262 = vlaneseq
        %v263 = vshrl.u32 %v262, 7
        %vm264 = vcmp.lt.s32.totalorder %v263, 6
        %265 = vst.msk [vmem:[%s240] sm:$0xff] %vm264, %v261
        %s266 = scalar_lea.vmem %s240, 8 [#allocation1]
        %s267 = scalar_lea.vmem %s232, 112 [#allocation0]
        %s268 = scalar_lea.vmem %s267, 7 [#allocation0]
        %v269 = vld [vmem:[%s268] ss:$-1 sm:$0xff]
        %v270 = vrot.slane %v269, 2
        %271 = vst [vmem:[%s266] sm:$0xff] %v270
        %s272 = scalar_lea.vmem %s232, 120 [#allocation0]
        %s273 = scalar_lea.vmem %s272, 7 [#allocation0]
        %v274 = vld [vmem:[%s273] ss:$-1 sm:$0xff]
        %v275 = vrot.slane %v274, 2
        %v276 = vlaneseq
        %v277 = vshrl.u32 %v276, 7
        %vm278 = vcmp.lt.s32.totalorder %v277, 6
        %279 = vst.msk [vmem:[%s266] sm:$0xff] %vm278, %v275
        %s280 = scalar_lea.vmem %s240, 16 [#allocation1]
        %s281 = scalar_lea.vmem %s232, 104 [#allocation0]
        %s282 = scalar_lea.vmem %s281, 7 [#allocation0]
        %v283 = vld [vmem:[%s282] ss:$-1 sm:$0xff]
        %v284 = vrot.slane %v283, 2
        %285 = vst [vmem:[%s280] sm:$0xff] %v284
        %s286 = scalar_lea.vmem %s232, 112 [#allocation0]
        %s287 = scalar_lea.vmem %s286, 7 [#allocation0]
        %v288 = vld [vmem:[%s287] ss:$-1 sm:$0xff]
        %v289 = vrot.slane %v288, 2
        %v290 = vlaneseq
        %v291 = vshrl.u32 %v290, 7
        %vm292 = vcmp.lt.s32.totalorder %v291, 6
        %293 = vst.msk [vmem:[%s280] sm:$0xff] %vm292, %v289
        %s294 = scalar_lea.vmem %s240, 24 [#allocation1]
        %s295 = scalar_lea.vmem %s232, 96 [#allocation0]
        %s296 = scalar_lea.vmem %s295, 7 [#allocation0]
        %v297 = vld [vmem:[%s296] ss:$-1 sm:$0xff]
        %v298 = vrot.slane %v297, 2
        %299 = vst [vmem:[%s294] sm:$0xff] %v298
        %s300 = scalar_lea.vmem %s232, 104 [#allocation0]
        %s301 = scalar_lea.vmem %s300, 7 [#allocation0]
        %v302 = vld [vmem:[%s301] ss:$-1 sm:$0xff]
        %v303 = vrot.slane %v302, 2
        %v304 = vlaneseq
        %v305 = vshrl.u32 %v304, 7
        %vm306 = vcmp.lt.s32.totalorder %v305, 6
        %307 = vst.msk [vmem:[%s294] sm:$0xff] %vm306, %v303
        %s308 = scalar_lea.vmem %s240, 32 [#allocation1]
        %s309 = scalar_lea.vmem %s232, 88 [#allocation0]
        %s310 = scalar_lea.vmem %s309, 7 [#allocation0]
        %v311 = vld [vmem:[%s310] ss:$-1 sm:$0xff]
        %v312 = vrot.slane %v311, 2
        %313 = vst [vmem:[%s308] sm:$0xff] %v312
        %s314 = scalar_lea.vmem %s232, 96 [#allocation0]
        %s315 = scalar_lea.vmem %s314, 7 [#allocation0]
        %v316 = vld [vmem:[%s315] ss:$-1 sm:$0xff]
        %v317 = vrot.slane %v316, 2
        %v318 = vlaneseq
        %v319 = vshrl.u32 %v318, 7
        %vm320 = vcmp.lt.s32.totalorder %v319, 6
        %321 = vst.msk [vmem:[%s308] sm:$0xff] %vm320, %v317
        %s322 = scalar_lea.vmem %s240, 40 [#allocation1]
        %s323 = scalar_lea.vmem %s232, 80 [#allocation0]
        %s324 = scalar_lea.vmem %s323, 7 [#allocation0]
        %v325 = vld [vmem:[%s324] ss:$-1 sm:$0xff]
        %v326 = vrot.slane %v325, 2
        %327 = vst [vmem:[%s322] sm:$0xff] %v326
        %s328 = scalar_lea.vmem %s232, 88 [#allocation0]
        %s329 = scalar_lea.vmem %s328, 7 [#allocation0]
        %v330 = vld [vmem:[%s329] ss:$-1 sm:$0xff]
        %v331 = vrot.slane %v330, 2
        %v332 = vlaneseq
        %v333 = vshrl.u32 %v332, 7
        %vm334 = vcmp.lt.s32.totalorder %v333, 6
        %335 = vst.msk [vmem:[%s322] sm:$0xff] %vm334, %v331
        %s336 = scalar_lea.vmem %s240, 48 [#allocation1]
        %s337 = scalar_lea.vmem %s232, 72 [#allocation0]
        %s338 = scalar_lea.vmem %s337, 7 [#allocation0]
        %v339 = vld [vmem:[%s338] ss:$-1 sm:$0xff]
        %v340 = vrot.slane %v339, 2
        %341 = vst [vmem:[%s336] sm:$0xff] %v340
        %s342 = scalar_lea.vmem %s232, 80 [#allocation0]
        %s343 = scalar_lea.vmem %s342, 7 [#allocation0]
        %v344 = vld [vmem:[%s343] ss:$-1 sm:$0xff]
        %v345 = vrot.slane %v344, 2
        %v346 = vlaneseq
        %v347 = vshrl.u32 %v346, 7
        %vm348 = vcmp.lt.s32.totalorder %v347, 6
        %349 = vst.msk [vmem:[%s336] sm:$0xff] %vm348, %v345
        %s350 = scalar_lea.vmem %s240, 56 [#allocation1]
        %s351 = scalar_lea.vmem %s232, 64 [#allocation0]
        %s352 = scalar_lea.vmem %s351, 7 [#allocation0]
        %v353 = vld [vmem:[%s352] ss:$-1 sm:$0xff]
        %v354 = vrot.slane %v353, 2
        %355 = vst [vmem:[%s350] sm:$0xff] %v354
        %s356 = scalar_lea.vmem %s232, 72 [#allocation0]
        %s357 = scalar_lea.vmem %s356, 7 [#allocation0]
        %v358 = vld [vmem:[%s357] ss:$-1 sm:$0xff]
        %v359 = vrot.slane %v358, 2
        %v360 = vlaneseq
        %v361 = vshrl.u32 %v360, 7
        %vm362 = vcmp.lt.s32.totalorder %v361, 6
        %363 = vst.msk [vmem:[%s350] sm:$0xff] %vm362, %v359
        %s364 = scalar_lea.vmem %s240, 64 [#allocation1]
        %s365 = scalar_lea.vmem %s232, 56 [#allocation0]
        %s366 = scalar_lea.vmem %s365, 7 [#allocation0]
        %v367 = vld [vmem:[%s366] ss:$-1 sm:$0xff]
        %v368 = vrot.slane %v367, 2
        %369 = vst [vmem:[%s364] sm:$0xff] %v368
        %s370 = scalar_lea.vmem %s232, 64 [#allocation0]
        %s371 = scalar_lea.vmem %s370, 7 [#allocation0]
        %v372 = vld [vmem:[%s371] ss:$-1 sm:$0xff]
        %v373 = vrot.slane %v372, 2
        %v374 = vlaneseq
        %v375 = vshrl.u32 %v374, 7
        %vm376 = vcmp.lt.s32.totalorder %v375, 6
        %377 = vst.msk [vmem:[%s364] sm:$0xff] %vm376, %v373
        %s378 = scalar_lea.vmem %s240, 72 [#allocation1]
        %s379 = scalar_lea.vmem %s232, 48 [#allocation0]
        %s380 = scalar_lea.vmem %s379, 7 [#allocation0]
        %v381 = vld [vmem:[%s380] ss:$-1 sm:$0xff]
        %v382 = vrot.slane %v381, 2
        %383 = vst [vmem:[%s378] sm:$0xff] %v382
        %s384 = scalar_lea.vmem %s232, 56 [#allocation0]
        %s385 = scalar_lea.vmem %s384, 7 [#allocation0]
        %v386 = vld [vmem:[%s385] ss:$-1 sm:$0xff]
        %v387 = vrot.slane %v386, 2
        %v388 = vlaneseq
        %v389 = vshrl.u32 %v388, 7
        %vm390 = vcmp.lt.s32.totalorder %v389, 6
        %391 = vst.msk [vmem:[%s378] sm:$0xff] %vm390, %v387
        %s392 = scalar_lea.vmem %s240, 80 [#allocation1]
        %s393 = scalar_lea.vmem %s232, 40 [#allocation0]
        %s394 = scalar_lea.vmem %s393, 7 [#allocation0]
        %v395 = vld [vmem:[%s394] ss:$-1 sm:$0xff]
        %v396 = vrot.slane %v395, 2
        %397 = vst [vmem:[%s392] sm:$0xff] %v396
        %s398 = scalar_lea.vmem %s232, 48 [#allocation0]
        %s399 = scalar_lea.vmem %s398, 7 [#allocation0]
        %v400 = vld [vmem:[%s399] ss:$-1 sm:$0xff]
        %v401 = vrot.slane %v400, 2
        %v402 = vlaneseq
        %v403 = vshrl.u32 %v402, 7
        %vm404 = vcmp.lt.s32.totalorder %v403, 6
        %405 = vst.msk [vmem:[%s392] sm:$0xff] %vm404, %v401
        %s406 = scalar_lea.vmem %s240, 88 [#allocation1]
        %s407 = scalar_lea.vmem %s232, 32 [#allocation0]
        %s408 = scalar_lea.vmem %s407, 7 [#allocation0]
        %v409 = vld [vmem:[%s408] ss:$-1 sm:$0xff]
        %v410 = vrot.slane %v409, 2
        %411 = vst [vmem:[%s406] sm:$0xff] %v410
        %s412 = scalar_lea.vmem %s232, 40 [#allocation0]
        %s413 = scalar_lea.vmem %s412, 7 [#allocation0]
        %v414 = vld [vmem:[%s413] ss:$-1 sm:$0xff]
        %v415 = vrot.slane %v414, 2
        %v416 = vlaneseq
        %v417 = vshrl.u32 %v416, 7
        %vm418 = vcmp.lt.s32.totalorder %v417, 6
        %419 = vst.msk [vmem:[%s406] sm:$0xff] %vm418, %v415
        %s420 = scalar_lea.vmem %s240, 96 [#allocation1]
        %s421 = scalar_lea.vmem %s232, 24 [#allocation0]
        %s422 = scalar_lea.vmem %s421, 7 [#allocation0]
        %v423 = vld [vmem:[%s422] ss:$-1 sm:$0xff]
        %v424 = vrot.slane %v423, 2
        %425 = vst [vmem:[%s420] sm:$0xff] %v424
        %s426 = scalar_lea.vmem %s232, 32 [#allocation0]
        %s427 = scalar_lea.vmem %s426, 7 [#allocation0]
        %v428 = vld [vmem:[%s427] ss:$-1 sm:$0xff]
        %v429 = vrot.slane %v428, 2
        %v430 = vlaneseq
        %v431 = vshrl.u32 %v430, 7
        %vm432 = vcmp.lt.s32.totalorder %v431, 6
        %433 = vst.msk [vmem:[%s420] sm:$0xff] %vm432, %v429
        %s434 = scalar_lea.vmem %s240, 104 [#allocation1]
        %s435 = scalar_lea.vmem %s232, 16 [#allocation0]
        %s436 = scalar_lea.vmem %s435, 7 [#allocation0]
        %v437 = vld [vmem:[%s436] ss:$-1 sm:$0xff]
        %v438 = vrot.slane %v437, 2
        %439 = vst [vmem:[%s434] sm:$0xff] %v438
        %s440 = scalar_lea.vmem %s232, 24 [#allocation0]
        %s441 = scalar_lea.vmem %s440, 7 [#allocation0]
        %v442 = vld [vmem:[%s441] ss:$-1 sm:$0xff]
        %v443 = vrot.slane %v442, 2
        %v444 = vlaneseq
        %v445 = vshrl.u32 %v444, 7
        %vm446 = vcmp.lt.s32.totalorder %v445, 6
        %447 = vst.msk [vmem:[%s434] sm:$0xff] %vm446, %v443
        %s448 = scalar_lea.vmem %s240, 112 [#allocation1]
        %s449 = scalar_lea.vmem %s232, 8 [#allocation0]
        %s450 = scalar_lea.vmem %s449, 7 [#allocation0]
        %v451 = vld [vmem:[%s450] ss:$-1 sm:$0xff]
        %v452 = vrot.slane %v451, 2
        %453 = vst [vmem:[%s448] sm:$0xff] %v452
        %s454 = scalar_lea.vmem %s232, 16 [#allocation0]
        %s455 = scalar_lea.vmem %s454, 7 [#allocation0]
        %v456 = vld [vmem:[%s455] ss:$-1 sm:$0xff]
        %v457 = vrot.slane %v456, 2
        %v458 = vlaneseq
        %v459 = vshrl.u32 %v458, 7
        %vm460 = vcmp.lt.s32.totalorder %v459, 6
        %461 = vst.msk [vmem:[%s448] sm:$0xff] %vm460, %v457
        %s462 = scalar_lea.vmem %s240, 120 [#allocation1]
        %s463 = scalar_lea.vmem %s232, 7 [#allocation0]
        %v464 = vld [vmem:[%s463] ss:$-1 sm:$0xff]
        %v465 = vrot.slane %v464, 2
        %466 = vst [vmem:[%s462] sm:$0xff] %v465
        %s467 = scalar_lea.vmem %s232, 8 [#allocation0]
        %s468 = scalar_lea.vmem %s467, 7 [#allocation0]
        %v469 = vld [vmem:[%s468] ss:$-1 sm:$0xff]
        %v470 = vrot.slane %v469, 2
        %v471 = vlaneseq
        %v472 = vshrl.u32 %v471, 7
        %vm473 = vcmp.lt.s32.totalorder %v472, 6
        %474 = vst.msk [vmem:[%s462] sm:$0xff] %vm473, %v470
        %s475 = sand.u32 %s8, 1
        %s476 = sand.u32 %s8, 1
        %s477 = smul.addr %s476, 128
        %s478 = scalar_lea.vmem [#allocation1], %s477
        %s479 = smul.u32 16, %s12
        %s480 = ssub.s32 45, %s479
        %p481 = scmp.lt.s32.totalorder %s480, 16
        %s482 = scalar_select %p481, %s480, 16
        %s483 = smul.u32 8, %s482
        %p484 = scmp.ne.s32.totalorder 0, %s483
        %s485 = sadd.s32 %s13, %s479
        %s486 = smul.addr %s485, 8
        %s487 = scalar_lea.vmem %s1, %s486
        // Predicated region
        $region69: #{reverse.1} parent=67 // pred_check
          %p488 = pneg %p484
        $region70: #{reverse.1} parent=67 // pred_check_branch
          %490 = sbr.rel (%p488) target = $region72
        $region71: #{reverse.1} parent=67 // pred_region
          // Predicated region
          $region73: #{reverse.1} parent=71 // pred_check
            _
          $region74: #{reverse.1} parent=71 // pred_check_branch
            %492 = sbr.rel (0) target = $region76
          $region75: #{reverse.1} parent=71 // pred_region
            // Predicated region
            $region95: #{reverse.1} parent=75 // pred_check
              _
            $region96: #{reverse.1} parent=75 // pred_check_branch
              %572 = sbr.rel (0) target = $region98
            $region97: #{reverse.1} parent=75 // pred_region
              %s573 = sshrl.u32 %s482, 4
              // While loop
              $region99: #{reverse.1} parent=97 // loop_pre_header
                _
              $region100: #{reverse.1} parent=97 // loop_header
                %s575 = sphi 0, %s577
                %p576 = scmp.ge.s32.totalorder %s575, %s573
                %s580 = sphi 0, %s617
                %s581 = sphi %s478, %s620
                %s582 = sphi %s487, %s621
              $region101: #{reverse.1} parent=97 // loop_header_branch
                %579 = sbr.rel (%p576) target = $region105
              $region102: #{reverse.1} parent=97 // loop_body
                %v583 = vld [vmem:[%s581] sm:$0xff]
                %584 = vst [vmem:[%s582] sm:$0xff] %v583
                %v585 = vld [vmem:[%s581 + $0x8] sm:$0xff]
                %586 = vst [vmem:[%s582 + $0x8] sm:$0xff] %v585
                %v587 = vld [vmem:[%s581 + $0x10] sm:$0xff]
                %588 = vst [vmem:[%s582 + $0x10] sm:$0xff] %v587
                %v589 = vld [vmem:[%s581 + $0x18] sm:$0xff]
                %590 = vst [vmem:[%s582 + $0x18] sm:$0xff] %v589
                %v591 = vld [vmem:[%s581 + $0x20] sm:$0xff]
                %592 = vst [vmem:[%s582 + $0x20] sm:$0xff] %v591
                %v593 = vld [vmem:[%s581 + $0x28] sm:$0xff]
                %594 = vst [vmem:[%s582 + $0x28] sm:$0xff] %v593
                %v595 = vld [vmem:[%s581 + $0x30] sm:$0xff]
                %596 = vst [vmem:[%s582 + $0x30] sm:$0xff] %v595
                %v597 = vld [vmem:[%s581 + $0x38] sm:$0xff]
                %598 = vst [vmem:[%s582 + $0x38] sm:$0xff] %v597
                %v599 = vld [vmem:[%s581 + $0x40] sm:$0xff]
                %600 = vst [vmem:[%s582 + $0x40] sm:$0xff] %v599
                %v601 = vld [vmem:[%s581 + $0x48] sm:$0xff]
                %602 = vst [vmem:[%s582 + $0x48] sm:$0xff] %v601
                %v603 = vld [vmem:[%s581 + $0x50] sm:$0xff]
                %604 = vst [vmem:[%s582 + $0x50] sm:$0xff] %v603
                %v605 = vld [vmem:[%s581 + $0x58] sm:$0xff]
                %606 = vst [vmem:[%s582 + $0x58] sm:$0xff] %v605
                %v607 = vld [vmem:[%s581 + $0x60] sm:$0xff]
                %608 = vst [vmem:[%s582 + $0x60] sm:$0xff] %v607
                %v609 = vld [vmem:[%s581 + $0x68] sm:$0xff]
                %610 = vst [vmem:[%s582 + $0x68] sm:$0xff] %v609
                %v611 = vld [vmem:[%s581 + $0x70] sm:$0xff]
                %612 = vst [vmem:[%s582 + $0x70] sm:$0xff] %v611
                %v613 = vld [vmem:[%s581 + $0x78] sm:$0xff]
                %614 = vst [vmem:[%s582 + $0x78] sm:$0xff] %v613
                %s615 = sadd.s32 1, %s580
                %p616 = scmp.ge.s32.totalorder %s615, %s573
                %s617 = scalar_select %p616, 0, %s615
                %s618 = smul.u32 %s617, 128
                %s619 = smul.u32 %s617, 128
                %s620 = scalar_lea.vmem %s478, %s618 [#allocation1]
                %s621 = scalar_lea.vmem %s487, %s619
              $region103: #{reverse.1} parent=97 // loop_footer
                %s577 = sadd.s32 %s575, 1
              $region104: #{reverse.1} parent=97 // loop_footer_branch
                %574 = sbr.rel target = $region100
              $region105: #{reverse.1} parent=97 // loop_exit
                _
              %s622 = sshrl.u32 %s482, 4
              %s623 = sand.u32 %s482, 15
              %s624 = smul.u32 %s622, 16
              %s625 = smul.u32 8, %s624
              %s626 = scalar_lea.vmem %s478, %s625 [#allocation1]
              %s627 = smul.u32 8, %s624
              %s628 = scalar_lea.vmem %s487, %s627
              // While loop
              $region106: #{reverse.1} parent=97 // loop_pre_header
                _
              $region107: #{reverse.1} parent=97 // loop_header
                %s630 = sphi 0, %s632
                %p631 = scmp.ge.s32.totalorder %s630, %s623
                %s635 = sphi 0, %s642
                %s636 = sphi %s626, %s645
                %s637 = sphi %s628, %s646
              $region108: #{reverse.1} parent=97 // loop_header_branch
                %634 = sbr.rel (%p631) target = $region112
              $region109: #{reverse.1} parent=97 // loop_body
                %v638 = vld [vmem:[%s636] sm:$0xff]
                %639 = vst [vmem:[%s637] sm:$0xff] %v638
                %s640 = sadd.s32 1, %s635
                %p641 = scmp.ge.s32.totalorder %s640, %s623
                %s642 = scalar_select %p641, 0, %s640
                %s643 = smul.u32 %s642, 8
                %s644 = smul.u32 %s642, 8
                %s645 = scalar_lea.vmem %s626, %s643 [#allocation1]
                %s646 = scalar_lea.vmem %s628, %s644
              $region110: #{reverse.1} parent=97 // loop_footer
                %s632 = sadd.s32 %s630, 1
              $region111: #{reverse.1} parent=97 // loop_footer_branch
                %629 = sbr.rel target = $region107
              $region112: #{reverse.1} parent=97 // loop_exit
                _
            $region98: #{reverse.1} parent=75 // pred_fallthru
              _
            // Predicated region
            $region113: #{reverse.1} parent=75 // pred_check
              _
            $region114: #{reverse.1} parent=75 // pred_check_branch
              %648 = sbr.rel target = $region116
            $region115: #{reverse.1} parent=75 // pred_region
              _
            $region116: #{reverse.1} parent=75 // pred_fallthru
              _
          $region76: #{reverse.1} parent=71 // pred_fallthru
            _
          // Predicated region
          $region77: #{reverse.1} parent=71 // pred_check
            _
          $region78: #{reverse.1} parent=71 // pred_check_branch
            %494 = sbr.rel target = $region80
          $region79: #{reverse.1} parent=71 // pred_region
            %s496 = ssub.s32 256, 1
            %s497 = sshrl.u32 %s482, 4
            // While loop
            $region81: #{reverse.1} parent=79 // loop_pre_header
              _
            $region82: #{reverse.1} parent=79 // loop_header
              %s499 = sphi 0, %s501
              %p500 = scmp.ge.s32.totalorder %s499, %s497
              %s504 = sphi 0, %s541
              %s505 = sphi %s478, %s544
              %s506 = sphi %s487, %s545
            $region83: #{reverse.1} parent=79 // loop_header_branch
              %503 = sbr.rel (%p500) target = $region87
            $region84: #{reverse.1} parent=79 // loop_body
              %v507 = vld [vmem:[%s505] sm:%s496]
              %508 = vst [vmem:[%s506] sm:%s496] %v507
              %v509 = vld [vmem:[%s505 + $0x8] sm:%s496]
              %510 = vst [vmem:[%s506 + $0x8] sm:%s496] %v509
              %v511 = vld [vmem:[%s505 + $0x10] sm:%s496]
              %512 = vst [vmem:[%s506 + $0x10] sm:%s496] %v511
              %v513 = vld [vmem:[%s505 + $0x18] sm:%s496]
              %514 = vst [vmem:[%s506 + $0x18] sm:%s496] %v513
              %v515 = vld [vmem:[%s505 + $0x20] sm:%s496]
              %516 = vst [vmem:[%s506 + $0x20] sm:%s496] %v515
              %v517 = vld [vmem:[%s505 + $0x28] sm:%s496]
              %518 = vst [vmem:[%s506 + $0x28] sm:%s496] %v517
              %v519 = vld [vmem:[%s505 + $0x30] sm:%s496]
              %520 = vst [vmem:[%s506 + $0x30] sm:%s496] %v519
              %v521 = vld [vmem:[%s505 + $0x38] sm:%s496]
              %522 = vst [vmem:[%s506 + $0x38] sm:%s496] %v521
              %v523 = vld [vmem:[%s505 + $0x40] sm:%s496]
              %524 = vst [vmem:[%s506 + $0x40] sm:%s496] %v523
              %v525 = vld [vmem:[%s505 + $0x48] sm:%s496]
              %526 = vst [vmem:[%s506 + $0x48] sm:%s496] %v525
              %v527 = vld [vmem:[%s505 + $0x50] sm:%s496]
              %528 = vst [vmem:[%s506 + $0x50] sm:%s496] %v527
              %v529 = vld [vmem:[%s505 + $0x58] sm:%s496]
              %530 = vst [vmem:[%s506 + $0x58] sm:%s496] %v529
              %v531 = vld [vmem:[%s505 + $0x60] sm:%s496]
              %532 = vst [vmem:[%s506 + $0x60] sm:%s496] %v531
              %v533 = vld [vmem:[%s505 + $0x68] sm:%s496]
              %534 = vst [vmem:[%s506 + $0x68] sm:%s496] %v533
              %v535 = vld [vmem:[%s505 + $0x70] sm:%s496]
              %536 = vst [vmem:[%s506 + $0x70] sm:%s496] %v535
              %v537 = vld [vmem:[%s505 + $0x78] sm:%s496]
              %538 = vst [vmem:[%s506 + $0x78] sm:%s496] %v537
              %s539 = sadd.s32 1, %s504
              %p540 = scmp.ge.s32.totalorder %s539, %s497
              %s541 = scalar_select %p540, 0, %s539
              %s542 = smul.u32 %s541, 128
              %s543 = smul.u32 %s541, 128
              %s544 = scalar_lea.vmem %s478, %s542 [#allocation1]
              %s545 = scalar_lea.vmem %s487, %s543
            $region85: #{reverse.1} parent=79 // loop_footer
              %s501 = sadd.s32 %s499, 1
            $region86: #{reverse.1} parent=79 // loop_footer_branch
              %498 = sbr.rel target = $region82
            $region87: #{reverse.1} parent=79 // loop_exit
              _
            %s546 = sshrl.u32 %s482, 4
            %s547 = sand.u32 %s482, 15
            %s548 = smul.u32 %s546, 16
            %s549 = smul.u32 8, %s548
            %s550 = scalar_lea.vmem %s478, %s549 [#allocation1]
            %s551 = smul.u32 8, %s548
            %s552 = scalar_lea.vmem %s487, %s551
            // While loop
            $region88: #{reverse.1} parent=79 // loop_pre_header
              _
            $region89: #{reverse.1} parent=79 // loop_header
              %s554 = sphi 0, %s556
              %p555 = scmp.ge.s32.totalorder %s554, %s547
              %s559 = sphi 0, %s566
              %s560 = sphi %s550, %s569
              %s561 = sphi %s552, %s570
            $region90: #{reverse.1} parent=79 // loop_header_branch
              %558 = sbr.rel (%p555) target = $region94
            $region91: #{reverse.1} parent=79 // loop_body
              %v562 = vld [vmem:[%s560] sm:%s496]
              %563 = vst [vmem:[%s561] sm:%s496] %v562
              %s564 = sadd.s32 1, %s559
              %p565 = scmp.ge.s32.totalorder %s564, %s547
              %s566 = scalar_select %p565, 0, %s564
              %s567 = smul.u32 %s566, 8
              %s568 = smul.u32 %s566, 8
              %s569 = scalar_lea.vmem %s550, %s567 [#allocation1]
              %s570 = scalar_lea.vmem %s552, %s568
            $region92: #{reverse.1} parent=79 // loop_footer
              %s556 = sadd.s32 %s554, 1
            $region93: #{reverse.1} parent=79 // loop_footer_branch
              %553 = sbr.rel target = $region89
            $region94: #{reverse.1} parent=79 // loop_exit
              _
          $region80: #{reverse.1} parent=71 // pred_fallthru
            _
        $region72: #{reverse.1} parent=67 // pred_fallthru
          _
        %649 = vnop
      $region68: #{reverse.1} parent=5 // pred_fallthru
        _
      %p650 = scmp.le.s32.totalorder 2, %s3
      // Predicated region
      $region117: #{reverse.1} parent=5 // pred_check
        %p651 = pneg %p650
      $region118: #{reverse.1} parent=5 // pred_check_branch
        %653 = sbr.rel (%p651) target = $region120
      $region119: #{reverse.1} parent=5 // pred_region
        %s654 = ssub.s32 %s3, 2
        %s655 = sand.u32 %s9, 1
        %s656 = sand.u32 %s9, 1
        %s657 = smul.addr %s656, 128
        %s658 = scalar_lea.vmem [#allocation1], %s657
      $region120: #{reverse.1} parent=5 // pred_fallthru
        _
    $region6: #{reverse.1} parent=1 // loop_footer
      %s7 = sadd.s32 1, %s3
    $region7: #{reverse.1} parent=1 // loop_footer_branch
      %2 = sbr.rel target = $region3
    $region8: #{reverse.1} parent=1 // loop_exit
      _

// kernel: bandpass.2
$region0: #{bandpass.2}
  #allocation0 [shape = 'u32[]', space=smem, size = 0x4, offset = 0x4, fixed_abs, tag = 'smem constant byte address 0x4 - core index']
  #allocation1 [shape = 'u32[72,128]{1,0:T(1,128)}', space=vmem, size = 0x9000, scoped, tag = 'internal scratch']
  #allocation2 [shape = 'f32[16,128]{1,0:T(8,128)}', space=vmem, size = 0x2000, scoped, tag = 'scratch operand']
  %s0 = inlined_call_operand.vmem [shape: f32[16,128], index: 0, kind: input, shape index: {}]
  %s1 = inlined_call_operand.vmem [shape: f32[128,128], index: 1, kind: input, shape index: {}]
  %s2 = inlined_call_operand.vmem [shape: f32[128,16], index: 2, kind: input, shape index: {}]
  %s3 = inlined_call_operand.vmem [shape: f32[16,16], index: 3, kind: input, shape index: {}]
  %s4 = inlined_call_operand.vmem [shape: f32[16,128], index: 4, kind: input, shape index: {}]
  %s5 = inlined_call_operand.vmem [shape: f32[384,128], index: 5, kind: input, shape index: {}]
  %s6 = inlined_call_operand.vmem [shape: f32[384,128], index: 6, kind: output, shape index: {}]
  %s7 = sld [smem:[#allocation0]]
  $region61: #{bandpass.2} parent=0
    _
  %s9 = ssub.s32 1, %s7
  %s10 = scalar_select 0, %s9, %s7
  loop: start=0, step=1, limit=5
  $region2: #{bandpass.2} parent=0 // loop_pre_header
    _
  $region3: #{bandpass.2} parent=0 // loop_header
    %s12 = sphi 0, %s16
    %p13 = scmp.ge.s32.totalorder %s12, 5
    %s20 = sphi 0, %s20
    %s22 = sphi 0, %s20
    %s23 = sphi 0, %s22
    %s37 = sphi 0, %s23
    %s41 = sphi 0, %s41
    %s43 = sphi 0, %s41
    %s44 = sphi 0, %s43
    %s58 = sphi 0, %s44
    %s62 = sphi 0, %s62
    %s64 = sphi 0, %s62
    %s65 = sphi 0, %s64
    %s79 = sphi 0, %s65
    %s83 = sphi 0, %s83
    %s85 = sphi 0, %s83
    %s86 = sphi 0, %s85
    %s100 = sphi 0, %s86
    %s104 = sphi 0, %s104
    %s106 = sphi 0, %s104
    %s107 = sphi 0, %s106
    %s121 = sphi 0, %s107
    %s127 = sphi 0, %s129
    %s130 = sphi 0, %s127
    %s131 = sphi 0, %s130
    %s147 = sphi 0, %s131
    %s153 = sphi 0, %s155
    %s156 = sphi 0, %s153
    %s157 = sphi 0, %s156
    %s173 = sphi 0, %s157
  $region4: #{bandpass.2} parent=0 // loop_header_branch
    %15 = sbr.rel (%p13) target = $region8
  $region5: #{bandpass.2} parent=0 // loop_body
    %s17 = ssub.s32 %s12, 1
    %s18 = ssub.s32 %s12, 2
    %s19 = sadd.s32 %s12, 1
    %s21 = sadd.s32 %s20, 1
    %p24 = scmp.eq.s32.totalorder %s12, 2
    %p25 = scmp.ne.s32.totalorder %s20, %s22
    %p26 = scmp.eq.s32.totalorder %s12, 0
    %p27 = por %p25, %p26
    %p28 = scmp.ne.s32.totalorder %s20, %s22
    %p29 = scmp.eq.s32.totalorder %s17, 2
    %p30 = por %p28, %p29
    %p31 = scmp.ne.s32.totalorder %s22, %s23
    %p32 = scmp.eq.s32.totalorder %s17, 0
    %p33 = por %p31, %p32
    %p34 = scmp.ne.s32.totalorder %s22, %s23
    %p35 = scmp.eq.s32.totalorder %s18, 2
    %p36 = por %p34, %p35
    %p38 = scmp.ne.s32.totalorder %s23, %s37
    %p39 = scmp.eq.s32.totalorder %s18, 0
    %p40 = por %p38, %p39
    %s42 = sadd.s32 %s41, 1
    %p45 = scmp.eq.s32.totalorder %s12, 2
    %p46 = scmp.ne.s32.totalorder %s41, %s43
    %p47 = scmp.eq.s32.totalorder %s12, 0
    %p48 = por %p46, %p47
    %p49 = scmp.ne.s32.totalorder %s41, %s43
    %p50 = scmp.eq.s32.totalorder %s17, 2
    %p51 = por %p49, %p50
    %p52 = scmp.ne.s32.totalorder %s43, %s44
    %p53 = scmp.eq.s32.totalorder %s17, 0
    %p54 = por %p52, %p53
    %p55 = scmp.ne.s32.totalorder %s43, %s44
    %p56 = scmp.eq.s32.totalorder %s18, 2
    %p57 = por %p55, %p56
    %p59 = scmp.ne.s32.totalorder %s44, %s58
    %p60 = scmp.eq.s32.totalorder %s18, 0
    %p61 = por %p59, %p60
    %s63 = sadd.s32 %s62, 1
    %p66 = scmp.eq.s32.totalorder %s12, 2
    %p67 = scmp.ne.s32.totalorder %s62, %s64
    %p68 = scmp.eq.s32.totalorder %s12, 0
    %p69 = por %p67, %p68
    %p70 = scmp.ne.s32.totalorder %s62, %s64
    %p71 = scmp.eq.s32.totalorder %s17, 2
    %p72 = por %p70, %p71
    %p73 = scmp.ne.s32.totalorder %s64, %s65
    %p74 = scmp.eq.s32.totalorder %s17, 0
    %p75 = por %p73, %p74
    %p76 = scmp.ne.s32.totalorder %s64, %s65
    %p77 = scmp.eq.s32.totalorder %s18, 2
    %p78 = por %p76, %p77
    %p80 = scmp.ne.s32.totalorder %s65, %s79
    %p81 = scmp.eq.s32.totalorder %s18, 0
    %p82 = por %p80, %p81
    %s84 = sadd.s32 %s83, 1
    %p87 = scmp.eq.s32.totalorder %s12, 2
    %p88 = scmp.ne.s32.totalorder %s83, %s85
    %p89 = scmp.eq.s32.totalorder %s12, 0
    %p90 = por %p88, %p89
    %p91 = scmp.ne.s32.totalorder %s83, %s85
    %p92 = scmp.eq.s32.totalorder %s17, 2
    %p93 = por %p91, %p92
    %p94 = scmp.ne.s32.totalorder %s85, %s86
    %p95 = scmp.eq.s32.totalorder %s17, 0
    %p96 = por %p94, %p95
    %p97 = scmp.ne.s32.totalorder %s85, %s86
    %p98 = scmp.eq.s32.totalorder %s18, 2
    %p99 = por %p97, %p98
    %p101 = scmp.ne.s32.totalorder %s86, %s100
    %p102 = scmp.eq.s32.totalorder %s18, 0
    %p103 = por %p101, %p102
    %s105 = sadd.s32 %s104, 1
    %p108 = scmp.eq.s32.totalorder %s12, 2
    %p109 = scmp.ne.s32.totalorder %s104, %s106
    %p110 = scmp.eq.s32.totalorder %s12, 0
    %p111 = por %p109, %p110
    %p112 = scmp.ne.s32.totalorder %s104, %s106
    %p113 = scmp.eq.s32.totalorder %s17, 2
    %p114 = por %p112, %p113
    %p115 = scmp.ne.s32.totalorder %s106, %s107
    %p116 = scmp.eq.s32.totalorder %s17, 0
    %p117 = por %p115, %p116
    %p118 = scmp.ne.s32.totalorder %s106, %s107
    %p119 = scmp.eq.s32.totalorder %s18, 2
    %p120 = por %p118, %p119
    %p122 = scmp.ne.s32.totalorder %s107, %s121
    %p123 = scmp.eq.s32.totalorder %s18, 0
    %p124 = por %p122, %p123
    %s125 = ssub.s32 %s12, %s19
    %p126 = scmp.eq.s32.totalorder %s125, 0
    %s128 = sadd.s32 %s127, 1
    %s129 = scalar_select %p126, %s127, %s128
    %p132 = pneg %p126
    %p133 = scmp.eq.s32.totalorder %s12, 2
    %p134 = por %p132, %p133
    %p135 = scmp.ne.s32.totalorder %s127, %s130
    %p136 = scmp.eq.s32.totalorder %s12, 0
    %p137 = por %p135, %p136
    %p138 = scmp.ne.s32.totalorder %s127, %s130
    %p139 = scmp.eq.s32.totalorder %s17, 2
    %p140 = por %p138, %p139
    %p141 = scmp.ne.s32.totalorder %s130, %s131
    %p142 = scmp.eq.s32.totalorder %s17, 0
    %p143 = por %p141, %p142
    %p144 = scmp.ne.s32.totalorder %s130, %s131
    %p145 = scmp.eq.s32.totalorder %s18, 2
    %p146 = por %p144, %p145
    %p148 = scmp.ne.s32.totalorder %s131, %s147
    %p149 = scmp.eq.s32.totalorder %s18, 0
    %p150 = por %p148, %p149
    %s151 = ssub.s32 %s12, %s19
    %p152 = scmp.eq.s32.totalorder %s151, 0
    %s154 = sadd.s32 %s153, 1
    %s155 = scalar_select %p152, %s153, %s154
    %p158 = pneg %p152
    %p159 = scmp.eq.s32.totalorder %s12, 2
    %p160 = por %p158, %p159
    %p161 = scmp.ne.s32.totalorder %s153, %s156
    %p162 = scmp.eq.s32.totalorder %s12, 0
    %p163 = por %p161, %p162
    %p164 = scmp.ne.s32.totalorder %s153, %s156
    %p165 = scmp.eq.s32.totalorder %s17, 2
    %p166 = por %p164, %p165
    %p167 = scmp.ne.s32.totalorder %s156, %s157
    %p168 = scmp.eq.s32.totalorder %s17, 0
    %p169 = por %p167, %p168
    %p170 = scmp.ne.s32.totalorder %s156, %s157
    %p171 = scmp.eq.s32.totalorder %s18, 2
    %p172 = por %p170, %p171
    %p174 = scmp.ne.s32.totalorder %s157, %s173
    %p175 = scmp.eq.s32.totalorder %s18, 0
    %p176 = por %p174, %p175
    %p177 = scmp.le.s32.totalorder 1, %s12
    %p178 = scmp.lt.s32.totalorder %s12, 4
    %p179 = pnand %p177, %p178
    %p180 = pneg %p179
    // Predicated region
    $region9: #{bandpass.2} parent=5 // pred_check
      _
    $region10: #{bandpass.2} parent=5 // pred_check_branch
      %182 = sbr.rel (%p179) target = $region12
    $region11: #{bandpass.2} parent=5 // pred_region
      %s183 = ssub.s32 %s12, 1
      // Predicated region
      $region13: #{bandpass.2} parent=11 // pred_check
        %p184 = pneg %p33
      $region14: #{bandpass.2} parent=11 // pred_check_branch
        %186 = sbr.rel (%p184) target = $region16
      $region15: #{bandpass.2} parent=11 // pred_region
        _
      $region16: #{bandpass.2} parent=11 // pred_fallthru
        _
      // Predicated region
      $region17: #{bandpass.2} parent=11 // pred_check
        %p187 = pneg %p54
      $region18: #{bandpass.2} parent=11 // pred_check_branch
        %189 = sbr.rel (%p187) target = $region20
      $region19: #{bandpass.2} parent=11 // pred_region
        _
      $region20: #{bandpass.2} parent=11 // pred_fallthru
        _
      // Predicated region
      $region21: #{bandpass.2} parent=11 // pred_check
        %p190 = pneg %p75
      $region22: #{bandpass.2} parent=11 // pred_check_branch
        %192 = sbr.rel (%p190) target = $region24
      $region23: #{bandpass.2} parent=11 // pred_region
        _
      $region24: #{bandpass.2} parent=11 // pred_fallthru
        _
      // Predicated region
      $region25: #{bandpass.2} parent=11 // pred_check
        %p193 = pneg %p96
      $region26: #{bandpass.2} parent=11 // pred_check_branch
        %195 = sbr.rel (%p193) target = $region28
      $region27: #{bandpass.2} parent=11 // pred_region
        _
      $region28: #{bandpass.2} parent=11 // pred_fallthru
        _
      // Predicated region
      $region29: #{bandpass.2} parent=11 // pred_check
        %p196 = pneg %p117
      $region30: #{bandpass.2} parent=11 // pred_check_branch
        %198 = sbr.rel (%p196) target = $region32
      $region31: #{bandpass.2} parent=11 // pred_region
        _
      $region32: #{bandpass.2} parent=11 // pred_fallthru
        _
    $region12: #{bandpass.2} parent=5 // pred_fallthru
      _
    %p199 = scmp.lt.s32.totalorder %s12, 3
    // Predicated region
    $region33: #{bandpass.2} parent=5 // pred_check
      %p200 = pneg %p199
    $region34: #{bandpass.2} parent=5 // pred_check_branch
      %202 = sbr.rel (%p200) target = $region36
    $region35: #{bandpass.2} parent=5 // pred_region
      // Predicated region
      $region37: #{bandpass.2} parent=35 // pred_check
        %p203 = pneg %p137
      $region38: #{bandpass.2} parent=35 // pred_check_branch
        %205 = sbr.rel (%p203) target = $region40
      $region39: #{bandpass.2} parent=35 // pred_region
        %s206 = smul.u32 16, %s12
        %p207 = scmp.lt.s32.totalorder %s206, 47
        %s208 = scalar_select %p207, %s206, 47
        %s209 = smul.addr %s208, 8
        %s210 = scalar_lea.vmem %s5, %s209
        %s211 = smul.u32 16, %s12
      $region40: #{bandpass.2} parent=35 // pred_fallthru
        _
    $region36: #{bandpass.2} parent=5 // pred_fallthru
      _
    %p212 = scmp.le.s32.totalorder 1, %s12
    %p213 = scmp.lt.s32.totalorder %s12, 4
    %p214 = pnand %p212, %p213
    %p215 = pneg %p214
    // Predicated region
    $region41: #{bandpass.2} parent=5 // pred_check
      _
    $region42: #{bandpass.2} parent=5 // pred_check_branch
      %217 = sbr.rel (%p214) target = $region44
    $region43: #{bandpass.2} parent=5 // pred_region
      %s218 = ssub.s32 %s12, 1
      %p219 = pneg %p33
      %p220 = pneg %p30
      %p221 = pneg %p54
      %p222 = pneg %p51
      %p223 = pneg %p75
      %p224 = pneg %p72
      %p225 = pneg %p96
      %p226 = pneg %p93
      %p227 = pneg %p117
      %p228 = pneg %p114
      %s229 = smul.u32 16, %s17
      %p230 = scmp.lt.s32.totalorder %s229, 47
      %s231 = scalar_select %p230, %s229, 47
      %s232 = smul.addr %s231, 8
      %s233 = scalar_lea.vmem %s5, %s232
      %p234 = pneg %p143
      %p235 = pneg %p140
      %p236 = pneg %p169
      %p237 = pneg %p166
      %s238 = smul.u32 16, %s17
      %p239 = scmp.lt.s32.totalorder %s238, 47
      %s240 = scalar_select %p239, %s238, 47
      %s241 = smul.addr %s240, 8
      %s242 = scalar_lea.vmem %s6, %s241
      %s243 = smul.u32 16, %s17
      %p244 = scmp.lt.s32.totalorder %s243, 47
      %s245 = scalar_select %p244, %s243, 47
      %s246 = smul.addr %s245, 8
      %s247 = scalar_lea.vmem %s5, %s246
      %s248 = smul.u32 16, %s17
      %s249 = smul.u32 16, %s17
      %p250 = scmp.lt.s32.totalorder %s249, 47
      %s251 = scalar_select %p250, %s249, 47
      %s252 = smul.addr %s251, 8
      %s253 = scalar_lea.vmem %s6, %s252
      %s254 = smul.u32 16, %s17
      %p255 = scmp.eq.s32.totalorder %s17, 0
      // Predicated region
      $region45: #{bandpass.2} parent=43 // pred_check
        %p256 = pneg %p255
      $region46: #{bandpass.2} parent=43 // pred_check_branch
        %258 = sbr.rel (%p256) target = $region48
      $region47: #{bandpass.2} parent=43 // pred_region
        %v259 = vld [vmem:[%s0] sm:$0xff]
        %v260 = vld [vmem:[%s0 + $0x8] sm:$0xff]
        %261 = vst [vmem:[#allocation2] sm:$0xff] %v259
        %262 = vst [vmem:[#allocation2 + $0x8] sm:$0xff] %v260
      $region48: #{bandpass.2} parent=43 // pred_fallthru
        _
      %v263 = vld [vmem:[#allocation2] sm:$0xff]
      %v264 = vld [vmem:[#allocation2 + $0x8] sm:$0xff]
      %v265 = vld [vmem:[%s247] sm:$0xff]
      %v266 = vld [vmem:[%s247 + $0x8] sm:$0xff]
      %v267 = vld [vmem:[%s247 + $0x10] sm:$0xff]
      %v268 = vld [vmem:[%s247 + $0x18] sm:$0xff]
      %v269 = vld [vmem:[%s247 + $0x20] sm:$0xff]
      %v270 = vld [vmem:[%s247 + $0x28] sm:$0xff]
      %v271 = vld [vmem:[%s247 + $0x30] sm:$0xff]
      %v272 = vld [vmem:[%s247 + $0x38] sm:$0xff]
      %v273 = vld [vmem:[%s247 + $0x40] sm:$0xff]
      %v274 = vld [vmem:[%s247 + $0x48] sm:$0xff]
      %v275 = vld [vmem:[%s247 + $0x50] sm:$0xff]
      %v276 = vld [vmem:[%s247 + $0x58] sm:$0xff]
      %v277 = vld [vmem:[%s247 + $0x60] sm:$0xff]
      %v278 = vld [vmem:[%s247 + $0x68] sm:$0xff]
      %v279 = vld [vmem:[%s247 + $0x70] sm:$0xff]
      %v280 = vld [vmem:[%s247 + $0x78] sm:$0xff]
      %v281 = vld [vmem:[%s1] sm:$0xff]
      %v282 = vld [vmem:[%s1 + $0x8] sm:$0xff]
      %v283 = vld [vmem:[%s1 + $0x10] sm:$0xff]
      %v284 = vld [vmem:[%s1 + $0x18] sm:$0xff]
      %v285 = vld [vmem:[%s1 + $0x20] sm:$0xff]
      %v286 = vld [vmem:[%s1 + $0x28] sm:$0xff]
      %v287 = vld [vmem:[%s1 + $0x30] sm:$0xff]
      %v288 = vld [vmem:[%s1 + $0x38] sm:$0xff]
      %v289 = vld [vmem:[%s1 + $0x40] sm:$0xff]
      %v290 = vld [vmem:[%s1 + $0x48] sm:$0xff]
      %v291 = vld [vmem:[%s1 + $0x50] sm:$0xff]
      %v292 = vld [vmem:[%s1 + $0x58] sm:$0xff]
      %v293 = vld [vmem:[%s1 + $0x60] sm:$0xff]
      %v294 = vld [vmem:[%s1 + $0x68] sm:$0xff]
      %v295 = vld [vmem:[%s1 + $0x70] sm:$0xff]
      %v296 = vld [vmem:[%s1 + $0x78] sm:$0xff]
      %v297 = vld [vmem:[%s2] sm:$0xff]
      %v298 = vld [vmem:[%s2 + $0x8] sm:$0xff]
      %v299 = vld [vmem:[%s2 + $0x10] sm:$0xff]
      %v300 = vld [vmem:[%s2 + $0x18] sm:$0xff]
      %v301 = vld [vmem:[%s2 + $0x20] sm:$0xff]
      %v302 = vld [vmem:[%s2 + $0x28] sm:$0xff]
      %v303 = vld [vmem:[%s2 + $0x30] sm:$0xff]
      %v304 = vld [vmem:[%s2 + $0x38] sm:$0xff]
      %v305 = vld [vmem:[%s2 + $0x40] sm:$0xff]
      %v306 = vld [vmem:[%s2 + $0x48] sm:$0xff]
      %v307 = vld [vmem:[%s2 + $0x50] sm:$0xff]
      %v308 = vld [vmem:[%s2 + $0x58] sm:$0xff]
      %v309 = vld [vmem:[%s2 + $0x60] sm:$0xff]
      %v310 = vld [vmem:[%s2 + $0x68] sm:$0xff]
      %v311 = vld [vmem:[%s2 + $0x70] sm:$0xff]
      %v312 = vld [vmem:[%s2 + $0x78] sm:$0xff]
      %vm313 = vcmask 130048
      %v315 = vsel %vm313, %v297, 0
      %v318 = vsel %vm313, %v298, 0
      %v321 = vsel %vm313, %v299, 0
      %v324 = vsel %vm313, %v300, 0
      %v327 = vsel %vm313, %v301, 0
      %v330 = vsel %vm313, %v302, 0
      %v333 = vsel %vm313, %v303, 0
      %v336 = vsel %vm313, %v304, 0
      %v339 = vsel %vm313, %v305, 0
      %v342 = vsel %vm313, %v306, 0
      %v345 = vsel %vm313, %v307, 0
      %v348 = vsel %vm313, %v308, 0
      %v351 = vsel %vm313, %v309, 0
      %v354 = vsel %vm313, %v310, 0
      %v357 = vsel %vm313, %v311, 0
      %v360 = vsel %vm313, %v312, 0
      %362 = vmatpush.msra.mxu0 0.0
      %363 = vmatpush.msra.mxu0 0.0
      %364 = vmatpush.msra.mxu0 0.0
      %365 = vmatpush.msra.mxu0 0.0
      %366 = vmatpush.msra.mxu0 0.0
      %367 = vmatpush.msra.mxu0 0.0
      %368 = vmatpush.msra.mxu0 0.0
      %369 = vmatpush.msra.mxu0 0.0
      %370 = vmatpush.msra.mxu0 0.0
      %371 = vmatpush.msra.mxu0 0.0
      %372 = vmatpush.msra.mxu0 0.0
      %373 = vmatpush.msra.mxu0 0.0
      %374 = vmatpush.msra.mxu0 0.0
      %375 = vmatpush.msra.mxu0 0.0
      %376 = vmatpush.msra.mxu0 %v264
      %377 = vmatpush.msra.mxu0 %v263
      %378 = vmatmul.f32.gmra.mxu0 %v315
      %v379 = vpop.f32.mrf.mxu0
      %v380 = vadd.f32 0.0, %v379
      %381 = vmatmul.f32.gmra.mxu0 %v318
      %v382 = vpop.f32.mrf.mxu0
      %v383 = vadd.f32 0.0, %v382
      %384 = vmatmul.f32.gmra.mxu0 %v321
      %v385 = vpop.f32.mrf.mxu0
      %v386 = vadd.f32 0.0, %v385
      %387 = vmatmul.f32.gmra.mxu0 %v324
      %v388 = vpop.f32.mrf.mxu0
      %v389 = vadd.f32 0.0, %v388
      %390 = vmatmul.f32.gmra.mxu0 %v327
      %v391 = vpop.f32.mrf.mxu0
      %v392 = vadd.f32 0.0, %v391
      %393 = vmatmul.f32.gmra.mxu0 %v330
      %v394 = vpop.f32.mrf.mxu0
      %v395 = vadd.f32 0.0, %v394
      %396 = vmatmul.f32.gmra.mxu0 %v333
      %v397 = vpop.f32.mrf.mxu0
      %v398 = vadd.f32 0.0, %v397
      %399 = vmatmul.f32.gmra.mxu0 %v336
      %v400 = vpop.f32.mrf.mxu0
      %v401 = vadd.f32 0.0, %v400
      %402 = vmatmul.f32.gmra.mxu0 %v339
      %v403 = vpop.f32.mrf.mxu0
      %v404 = vadd.f32 0.0, %v403
      %405 = vmatmul.f32.gmra.mxu0 %v342
      %v406 = vpop.f32.mrf.mxu0
      %v407 = vadd.f32 0.0, %v406
      %408 = vmatmul.f32.gmra.mxu0 %v345
      %v409 = vpop.f32.mrf.mxu0
      %v410 = vadd.f32 0.0, %v409
      %411 = vmatmul.f32.gmra.mxu0 %v348
      %v412 = vpop.f32.mrf.mxu0
      %v413 = vadd.f32 0.0, %v412
      %414 = vmatmul.f32.gmra.mxu0 %v351
      %v415 = vpop.f32.mrf.mxu0
      %v416 = vadd.f32 0.0, %v415
      %417 = vmatmul.f32.gmra.mxu0 %v354
      %v418 = vpop.f32.mrf.mxu0
      %v419 = vadd.f32 0.0, %v418
      %420 = vmatmul.f32.gmra.mxu0 %v357
      %v421 = vpop.f32.mrf.mxu0
      %v422 = vadd.f32 0.0, %v421
      %423 = vmatmul.f32.gmra.mxu0 %v360
      %v424 = vpop.f32.mrf.mxu0
      %v425 = vadd.f32 0.0, %v424
      %426 = vdwg.mxu0
      %427 = vmatpush.msra.mxu0 %v280
      %428 = vmatpush.msra.mxu0 %v279
      %429 = vmatpush.msra.mxu0 %v278
      %430 = vmatpush.msra.mxu0 %v277
      %431 = vmatpush.msra.mxu0 %v276
      %432 = vmatpush.msra.mxu0 %v275
      %433 = vmatpush.msra.mxu0 %v274
      %434 = vmatpush.msra.mxu0 %v273
      %435 = vmatpush.msra.mxu0 %v272
      %436 = vmatpush.msra.mxu0 %v271
      %437 = vmatpush.msra.mxu0 %v270
      %438 = vmatpush.msra.mxu0 %v269
      %439 = vmatpush.msra.mxu0 %v268
      %440 = vmatpush.msra.mxu0 %v267
      %441 = vmatpush.msra.mxu0 %v266
      %442 = vmatpush.msra.mxu0 %v265
      %443 = vmatmul.f32.gmra.mxu0 %v281
      %v444 = vpop.f32.mrf.mxu0
      %v445 = vadd.f32 %v380, %v444
      %446 = vmatmul.f32.gmra.mxu0 %v282
      %v447 = vpop.f32.mrf.mxu0
      %v448 = vadd.f32 %v383, %v447
      %449 = vmatmul.f32.gmra.mxu0 %v283
      %v450 = vpop.f32.mrf.mxu0
      %v451 = vadd.f32 %v386, %v450
      %452 = vmatmul.f32.gmra.mxu0 %v284
      %v453 = vpop.f32.mrf.mxu0
      %v454 = vadd.f32 %v389, %v453
      %455 = vmatmul.f32.gmra.mxu0 %v285
      %v456 = vpop.f32.mrf.mxu0
      %v457 = vadd.f32 %v392, %v456
      %458 = vmatmul.f32.gmra.mxu0 %v286
      %v459 = vpop.f32.mrf.mxu0
      %v460 = vadd.f32 %v395, %v459
      %461 = vmatmul.f32.gmra.mxu0 %v287
      %v462 = vpop.f32.mrf.mxu0
      %v463 = vadd.f32 %v398, %v462
      %464 = vmatmul.f32.gmra.mxu0 %v288
      %v465 = vpop.f32.mrf.mxu0
      %v466 = vadd.f32 %v401, %v465
      %467 = vmatmul.f32.gmra.mxu0 %v289
      %v468 = vpop.f32.mrf.mxu0
      %v469 = vadd.f32 %v404, %v468
      %470 = vmatmul.f32.gmra.mxu0 %v290
      %v471 = vpop.f32.mrf.mxu0
      %v472 = vadd.f32 %v407, %v471
      %473 = vmatmul.f32.gmra.mxu0 %v291
      %v474 = vpop.f32.mrf.mxu0
      %v475 = vadd.f32 %v410, %v474
      %476 = vmatmul.f32.gmra.mxu0 %v292
      %v477 = vpop.f32.mrf.mxu0
      %v478 = vadd.f32 %v413, %v477
      %479 = vmatmul.f32.gmra.mxu0 %v293
      %v480 = vpop.f32.mrf.mxu0
      %v481 = vadd.f32 %v416, %v480
      %482 = vmatmul.f32.gmra.mxu0 %v294
      %v483 = vpop.f32.mrf.mxu0
      %v484 = vadd.f32 %v419, %v483
      %485 = vmatmul.f32.gmra.mxu0 %v295
      %v486 = vpop.f32.mrf.mxu0
      %v487 = vadd.f32 %v422, %v486
      %488 = vmatmul.f32.gmra.mxu0 %v296
      %v489 = vpop.f32.mrf.mxu0
      %v490 = vadd.f32 %v425, %v489
      %491 = vdwg.mxu0
      %492 = vst [vmem:[%s253] sm:$0xff] %v445
      %493 = vst [vmem:[%s253 + $0x8] sm:$0xff] %v448
      %494 = vst [vmem:[%s253 + $0x10] sm:$0xff] %v451
      %495 = vst [vmem:[%s253 + $0x18] sm:$0xff] %v454
      %496 = vst [vmem:[%s253 + $0x20] sm:$0xff] %v457
      %497 = vst [vmem:[%s253 + $0x28] sm:$0xff] %v460
      %498 = vst [vmem:[%s253 + $0x30] sm:$0xff] %v463
      %499 = vst [vmem:[%s253 + $0x38] sm:$0xff] %v466
      %500 = vst [vmem:[%s253 + $0x40] sm:$0xff] %v469
      %501 = vst [vmem:[%s253 + $0x48] sm:$0xff] %v472
      %502 = vst [vmem:[%s253 + $0x50] sm:$0xff] %v475
      %503 = vst [vmem:[%s253 + $0x58] sm:$0xff] %v478
      %504 = vst [vmem:[%s253 + $0x60] sm:$0xff] %v481
      %505 = vst [vmem:[%s253 + $0x68] sm:$0xff] %v484
      %506 = vst [vmem:[%s253 + $0x70] sm:$0xff] %v487
      %507 = vst [vmem:[%s253 + $0x78] sm:$0xff] %v490
      %v508 = vld [vmem:[%s3] sm:$0xff]
      %v509 = vld [vmem:[%s3 + $0x8] sm:$0xff]
      %v510 = vld [vmem:[%s4] sm:$0xff]
      %v511 = vld [vmem:[%s4 + $0x8] sm:$0xff]
      %512 = vmatpush.msra.mxu0 %v280
      %513 = vmatpush.msra.mxu0 %v279
      %514 = vmatpush.msra.mxu0 %v278
      %515 = vmatpush.msra.mxu0 %v277
      %516 = vmatpush.msra.mxu0 %v276
      %517 = vmatpush.msra.mxu0 %v275
      %518 = vmatpush.msra.mxu0 %v274
      %519 = vmatpush.msra.mxu0 %v273
      %520 = vmatpush.msra.mxu0 %v272
      %521 = vmatpush.msra.mxu0 %v271
      %522 = vmatpush.msra.mxu0 %v270
      %523 = vmatpush.msra.mxu0 %v269
      %524 = vmatpush.msra.mxu0 %v268
      %525 = vmatpush.msra.mxu0 %v267
      %526 = vmatpush.msra.mxu0 %v266
      %527 = vmatpush.msra.mxu0 %v265
      %528 = vmatmul.f32.gmra.mxu0 %v510
      %v529 = vpop.f32.mrf.mxu0
      %v530 = vadd.f32 0.0, %v529
      %531 = vmatmul.f32.gmra.mxu0 %v511
      %v532 = vpop.f32.mrf.mxu0
      %v533 = vadd.f32 0.0, %v532
      %534 = vdwg.mxu0
      %v536 = vsel %vm313, %v508, 0
      %v539 = vsel %vm313, %v509, 0
      %541 = vmatpush.msra.mxu0 0.0
      %542 = vmatpush.msra.mxu0 0.0
      %543 = vmatpush.msra.mxu0 0.0
      %544 = vmatpush.msra.mxu0 0.0
      %545 = vmatpush.msra.mxu0 0.0
      %546 = vmatpush.msra.mxu0 0.0
      %547 = vmatpush.msra.mxu0 0.0
      %548 = vmatpush.msra.mxu0 0.0
      %549 = vmatpush.msra.mxu0 0.0
      %550 = vmatpush.msra.mxu0 0.0
      %551 = vmatpush.msra.mxu0 0.0
      %552 = vmatpush.msra.mxu0 0.0
      %553 = vmatpush.msra.mxu0 0.0
      %554 = vmatpush.msra.mxu0 0.0
      %555 = vmatpush.msra.mxu0 %v264
      %556 = vmatpush.msra.mxu0 %v263
      %557 = vmatmul.f32.gmra.mxu0 %v536
      %v558 = vpop.f32.mrf.mxu0
      %v559 = vadd.f32 %v530, %v558
      %560 = vmatmul.f32.gmra.mxu0 %v539
      %v561 = vpop.f32.mrf.mxu0
      %v562 = vadd.f32 %v533, %v561
      %563 = vdwg.mxu0
      %564 = vst [vmem:[#allocation2] sm:$0xff] %v559
      %565 = vst [vmem:[#allocation2 + $0x8] sm:$0xff] %v562
      %s566 = smul.u32 16, %s17
      %p567 = scmp.lt.s32.totalorder %s566, 47
      %s568 = scalar_select %p567, %s566, 47
      %s569 = smul.addr %s568, 8
      %s570 = scalar_lea.vmem %s6, %s569
      // Predicated region
      $region49: #{bandpass.2} parent=43 // pred_check
        %p571 = pneg %p166
      $region50: #{bandpass.2} parent=43 // pred_check_branch
        %573 = sbr.rel (%p571) target = $region52
      $region51: #{bandpass.2} parent=43 // pred_region
        %s574 = smul.u32 16, %s17
      $region52: #{bandpass.2} parent=43 // pred_fallthru
        _
    $region44: #{bandpass.2} parent=5 // pred_fallthru
      _
    %p575 = scmp.le.s32.totalorder 2, %s12
    // Predicated region
    $region53: #{bandpass.2} parent=5 // pred_check
      %p576 = pneg %p575
    $region54: #{bandpass.2} parent=5 // pred_check_branch
      %578 = sbr.rel (%p576) target = $region56
    $region55: #{bandpass.2} parent=5 // pred_region
      %s579 = ssub.s32 %s12, 2
      // Predicated region
      $region57: #{bandpass.2} parent=55 // pred_check
        %p580 = pneg %p172
      $region58: #{bandpass.2} parent=55 // pred_check_branch
        %582 = sbr.rel (%p580) target = $region60
      $region59: #{bandpass.2} parent=55 // pred_region
        %s583 = smul.u32 16, %s18
        %p584 = scmp.lt.s32.totalorder %s583, 47
        %s585 = scalar_select %p584, %s583, 47
        %s586 = smul.addr %s585, 8
        %s587 = scalar_lea.vmem %s6, %s586
      $region60: #{bandpass.2} parent=55 // pred_fallthru
        _
    $region56: #{bandpass.2} parent=5 // pred_fallthru
      _
  $region6: #{bandpass.2} parent=0 // loop_footer
    %s16 = sadd.s32 1, %s12
  $region7: #{bandpass.2} parent=0 // loop_footer_branch
    %11 = sbr.rel target = $region3
  $region8: #{bandpass.2} parent=0 // loop_exit
    _

</llo_original>
